<compile_context>
chip_gen: v5e
topology: v5e:2x2
jax: 0.10.0
libtpu: 0.0.40
codegen_flags: <defaults>
</compile_context>

<pallas_src>
import functools

import jax
import jax.numpy as jnp
from jax import lax
from jax.experimental import pallas as pl
from jax.experimental.pallas import tpu as pltpu

LANE = 128
# Matmul operand dtype (accumulation stays f32 via preferred_element_type).
MATMUL_DTYPE = jnp.bfloat16


def _round_up(x, m):
    return (x + m - 1) // m * m


# ----------------------------------------------------------------------------
# Kernel 1: fused conv stack (+ bias + ReLU) and the LSTM input projections for
# both directions.  Single grid step; all activations stay in VMEM, time-major.
# ----------------------------------------------------------------------------
def conv_gates_kernel(*refs, conv_cfg, Cp, Hp, B):
    n_layers = len(conv_cfg)
    x_ref = refs[0]
    layer_refs = refs[1:1 + 2 * n_layers]
    wi_ref, bi_ref = refs[1 + 2 * n_layers], refs[2 + 2 * n_layers]
    gf_ref, gb_ref = refs[3 + 2 * n_layers], refs[4 + 2 * n_layers]
    buf_ref = refs[5 + 2 * n_layers]

    cur = x_ref[...]                                    # (L0, B, Cp) f32
    for li, (k, s, p, d, L_in, L_out) in enumerate(conv_cfg):
        w_ref = layer_refs[2 * li]                      # (k, Cp, Cp) bf16
        b_ref = layer_refs[2 * li + 1]                  # (1, Cp) f32
        Lp_ = L_in + 2 * p
        # Conv1d zero padding lives on the leading (time) axis of the scratch;
        # only the 2p margin rows are zeroed (interior is fully overwritten).
        if p > 0:
            zrows = jnp.zeros((p, B, Cp), jnp.float32)
            buf_ref[0:p] = zrows
            buf_ref[p + L_in:Lp_] = zrows
        buf_ref[p:p + L_in] = cur
        bufv = buf_ref[0:Lp_]                           # (Lp_, B, Cp)
        span = (L_out - 1) * s + 1
        # k accumulating per-tap matmuls; tap slices are on the leading axis.
        # (For s > 1 the strided slice is untested by the reference config.)
        acc = jnp.zeros((L_out * B, Cp), jnp.float32)
        for j in range(k):
            if s == 1:
                tap = bufv[j * d:j * d + span]
            else:
                tap = bufv[j * d:j * d + span:s]
            tap2d = tap.reshape(L_out * B, Cp)
            acc = acc + jnp.dot(tap2d.astype(MATMUL_DTYPE), w_ref[j],
                                preferred_element_type=jnp.float32)
        cur = jnp.maximum(acc + b_ref[...], 0.0).reshape(L_out, B, Cp)

    # LSTM input projection for BOTH directions, hoisted out of the recurrence:
    # one (L*B, Cp) @ (Cp, 8*Hp) matmul, biases folded in here.
    L_f = conv_cfg[-1][5]
    xf = cur.reshape(L_f * B, Cp)
    g = jnp.dot(xf.astype(MATMUL_DTYPE), wi_ref[...],
                preferred_element_type=jnp.float32) + bi_ref[...]
    g = g.reshape(L_f, B, 8 * Hp)
    gf_ref[...] = g[:, :, :4 * Hp].astype(gf_ref.dtype)   # lane-dense stores
    gb_ref[...] = g[:, :, 4 * Hp:].astype(gb_ref.dtype)


def _full_block_specs(arrays):
    specs = []
    for a in arrays:
        nd = a.ndim
        specs.append(pl.BlockSpec(a.shape, lambda i, nd=nd: (0,) * nd))
    return specs


def conv_gates(x_p, prep):
    """x_p: (L0, B, Cp) time-major, channel-padded input -> bf16 gate inputs."""
    L0, B, Cp = x_p.shape
    Hp = prep["Hp"]

    conv_cfg = []
    L_in = L0
    for (wp, bp, k, s, p, d) in prep["conv_packed"]:
        L_out = (L_in + 2 * p - d * (k - 1) - 1) // s + 1
        conv_cfg.append((k, s, p, d, L_in, L_out))
        L_in = L_out
    L_f = L_in
    L_buf = max(cfg[4] + 2 * cfg[2] for cfg in conv_cfg)

    inputs = [x_p]
    for (wp, bp, k, s, p, d) in prep["conv_packed"]:
        inputs += [wp, bp]
    inputs += [prep["wi_fb"], prep["b_fb"]]

    # VMEM budget: 2x on in/out blocks for double buffering + scratch + rough
    # live-value estimate.  For production 2D-TAN shapes, tile over L/B instead
    # of this one-shot design.
    in_bytes = sum(int(a.size) * a.dtype.itemsize for a in inputs)
    out_bytes = 2 * L_f * B * 4 * Hp * 2
    scratch_bytes = L_buf * B * Cp * 4
    live_bytes = (2 * L_buf * B * Cp + L_f * B * 8 * Hp) * 4
    est = 2 * (in_bytes + out_bytes) + scratch_bytes + live_bytes
    assert est < 24 * 1024 * 1024, (
        "fused conv kernel would not fit VMEM; tile over L/B instead")

    kernel = functools.partial(conv_gates_kernel, conv_cfg=tuple(conv_cfg),
                               Cp=Cp, Hp=Hp, B=B)
    return pl.pallas_call(
        kernel,
        out_shape=(jax.ShapeDtypeStruct((L_f, B, 4 * Hp), jnp.bfloat16),
                   jax.ShapeDtypeStruct((L_f, B, 4 * Hp), jnp.bfloat16)),
        grid=(1,),
        in_specs=_full_block_specs(inputs),
        out_specs=[pl.BlockSpec((L_f, B, 4 * Hp), lambda i: (0, 0, 0)),
                   pl.BlockSpec((L_f, B, 4 * Hp), lambda i: (0, 0, 0))],
        scratch_shapes=[pltpu.VMEM((L_buf, B, Cp), jnp.float32)],
        compiler_params=pltpu.CompilerParams(
            dimension_semantics=("arbitrary",),
            vmem_limit_bytes=32 * 1024 * 1024),
    )(*inputs)


# ----------------------------------------------------------------------------
# Kernel 2: bidirectional LSTM recurrence, both directions packed into one
# (2B, Hp) state tile, gridded over L-chunks.  Gates already contain X@Wi + b;
# only the single packed h@Wh matmul is inside the serial loop.
# ----------------------------------------------------------------------------
def bilstm_chunk_kernel(gf_ref, gb_ref, wh_ref, of_ref, ob_ref,
                        h_ref, c_ref, *, Hp, B, T_c):
    @pl.when(pl.program_id(0) == 0)
    def _init():
        h_ref[...] = jnp.zeros(h_ref.shape, h_ref.dtype)
        c_ref[...] = jnp.zeros(c_ref.shape, c_ref.dtype)

    wh = wh_ref[...]                                     # (2Hp, 4Hp) bf16, resident
    row = lax.broadcasted_iota(jnp.int32, (2 * B, 1), 0)
    top = (row < B).astype(jnp.float32)                  # forward rows
    bot = 1.0 - top                                      # backward rows

    def body(t, carry):
        h, c = carry                                     # (2B, Hp) f32 each
        tr = T_c - 1 - t
        # rows 0:B = forward gates at t, rows B:2B = backward gates at tr
        gin = jnp.concatenate(
            [gf_ref[t].astype(jnp.float32), gb_ref[tr].astype(jnp.float32)],
            axis=0)                                      # (2B, 4Hp)
        # block-masked wide h so one matmul applies per-direction weights
        h_wide = jnp.concatenate([h * top, h * bot], axis=1)   # (2B, 2Hp)
        pre = gin + jnp.dot(h_wide.astype(wh.dtype), wh,
                            preferred_element_type=jnp.float32)
        i = jax.nn.sigmoid(pre[:, 0 * Hp:1 * Hp])        # 128-lane aligned slices
        f = jax.nn.sigmoid(pre[:, 1 * Hp:2 * Hp])
        g = jnp.tanh(pre[:, 2 * Hp:3 * Hp])
        o = jax.nn.sigmoid(pre[:, 3 * Hp:4 * Hp])
        c = f * c + i * g
        h = o * jnp.tanh(c)
        of_ref[t] = h[:B].astype(of_ref.dtype)
        ob_ref[tr] = h[B:].astype(ob_ref.dtype)
        return h, c

    h, c = lax.fori_loop(0, T_c, body, (h_ref[...], c_ref[...]),
                         unroll=min(8, T_c))
    h_ref[...] = h
    c_ref[...] = c


def bilstm(gf, gb, wh_packed, Hp, chunk=64):
    """gf/gb: (L, B, 4*Hp) time-major bf16 precomputed gate inputs."""
    L, B, G = gf.shape
    T_c = min(L, chunk)
    n_chunks = pl.cdiv(L, T_c)
    L_pad = n_chunks * T_c
    if L_pad != L:
        # Zero-padding the gate streams is exact: zero gates + zero state keep
        # the state exactly zero, so the backward direction still starts clean.
        pad = ((0, L_pad - L), (0, 0), (0, 0))
        gf = jnp.pad(gf, pad)
        gb = jnp.pad(gb, pad)

    kernel = functools.partial(bilstm_chunk_kernel, Hp=Hp, B=B, T_c=T_c)
    out_f, out_b = pl.pallas_call(
        kernel,
        out_shape=(jax.ShapeDtypeStruct((L_pad, B, Hp), jnp.float32),
                   jax.ShapeDtypeStruct((L_pad, B, Hp), jnp.float32)),
        grid=(n_chunks,),
        in_specs=[
            pl.BlockSpec((T_c, B, G), lambda i: (i, 0, 0)),
            pl.BlockSpec((T_c, B, G), lambda i, n=n_chunks: (n - 1 - i, 0, 0)),
            pl.BlockSpec(wh_packed.shape, lambda i: (0, 0)),
        ],
        out_specs=[
            pl.BlockSpec((T_c, B, Hp), lambda i: (i, 0, 0)),
            pl.BlockSpec((T_c, B, Hp), lambda i, n=n_chunks: (n - 1 - i, 0, 0)),
        ],
        scratch_shapes=[pltpu.VMEM((2 * B, Hp), jnp.float32),
                        pltpu.VMEM((2 * B, Hp), jnp.float32)],
        compiler_params=pltpu.CompilerParams(
            dimension_semantics=("arbitrary",),
            vmem_limit_bytes=32 * 1024 * 1024),
    )(gf, gb, wh_packed)
    if L_pad != L:
        out_f = out_f[:L]
        out_b = out_b[:L]
    return out_f, out_b


# ----------------------------------------------------------------------------
# Parameter preparation (call ONCE): zero-pad channels / hidden / gate blocks
# to 128 lanes, pack conv weights as (k, Cp, Cp), stack the two recurrent
# weights row-wise, and cast matmul operands to bf16.  The padding is exact:
# padded rows/cols/biases are zero and padded hidden lanes provably stay zero.
# ----------------------------------------------------------------------------
def prepare_padded_params(params, input_size):
    convs = params["convs"]
    channel_sizes = [input_size] + [w.shape[2] for (w, b, s, p, d) in convs]
    Cp = _round_up(max(channel_sizes), LANE)

    conv_packed = []
    for (w, b, s, p, d) in convs:
        k, ci, co = w.shape
        wp = jnp.pad(w, ((0, 0), (0, Cp - ci), (0, Cp - co))).astype(MATMUL_DTYPE)
        bp = jnp.pad(b, (0, Cp - co)).reshape(1, Cp).astype(jnp.float32)
        conv_packed.append((wp, bp, k, s, p, d))

    lp = params["lstm"]
    H = lp["wh_f"].shape[0]
    assert channel_sizes[-1] == H       # LSTM input size == hidden size
    Hp = _round_up(H, LANE)

    def pad_gate_cols(m):               # (R, 4H) -> (R, 4Hp), per-gate blocks
        R = m.shape[0]
        m4 = m.reshape(R, 4, H)
        return jnp.pad(m4, ((0, 0), (0, 0), (0, Hp - H))).reshape(R, 4 * Hp)

    def pad_rows(m, rows):
        return jnp.pad(m, ((0, rows - m.shape[0]), (0, 0)))

    wi_f = pad_rows(pad_gate_cols(lp["wi_f"]), Cp)
    wi_b = pad_rows(pad_gate_cols(lp["wi_b"]), Cp)
    wi_fb = jnp.concatenate([wi_f, wi_b], axis=1).astype(MATMUL_DTYPE)   # (Cp, 8Hp)
    b_fb = jnp.concatenate([pad_gate_cols(lp["b_f"]),
                            pad_gate_cols(lp["b_b"])],
                           axis=1).astype(jnp.float32)                   # (1, 8Hp)
    wh_f = pad_rows(pad_gate_cols(lp["wh_f"]), Hp)
    wh_b = pad_rows(pad_gate_cols(lp["wh_b"]), Hp)
    wh_packed = jnp.concatenate([wh_f, wh_b], axis=0).astype(MATMUL_DTYPE)  # (2Hp, 4Hp)
    return dict(Cp=Cp, Hp=Hp, H=H, conv_packed=conv_packed,
                wi_fb=wi_fb, b_fb=b_fb, wh_packed=wh_packed)


# ----------------------------------------------------------------------------
# Full forward (glue in plain JAX).  `prep` comes from prepare_padded_params,
# computed once outside the hot path.
# ----------------------------------------------------------------------------
def map_conv_forward(prep, textual_input, textual_mask, vis_h):
    del textual_input, textual_mask      # only printed in the original forward
    Cp, Hp, H = prep["Cp"], prep["Hp"], prep["H"]
    B, C_in, L = vis_h.shape

    # NCL -> time-major LBC and lane-pad channels (tiny one-time op on input).
    x = jnp.transpose(vis_h, (2, 0, 1)).astype(jnp.float32)
    x = jnp.pad(x, ((0, 0), (0, 0), (0, Cp - C_in)))

    gf, gb = conv_gates(x, prep)                           # (L, B, 4Hp) bf16
    out_f_tm, out_b_tm = bilstm(gf, gb, prep["wh_packed"], Hp)

    out_forward = jnp.transpose(out_f_tm, (1, 2, 0))[:, :H, :]    # (B, H, L)
    out_backward = jnp.transpose(out_b_tm, (1, 2, 0))[:, :H, :]   # (B, H, L)
    return out_forward, out_backward


# ----------------------------------------------------------------------------
# Deterministic parameter init (shapes per the nn.Module __init__)
# ----------------------------------------------------------------------------
def init_params(key, input_size, hidden_sizes, kernel_sizes, strides,
                paddings, dilations):
    channel_sizes = [input_size] + list(hidden_sizes)
    n = len(hidden_sizes)
    keys = jax.random.split(key, 2 * n + 8)
    convs = []
    for i, (ksz, s, p, d) in enumerate(zip(kernel_sizes, strides, paddings,
                                           dilations)):
        c_in, c_out = channel_sizes[i], channel_sizes[i + 1]
        # PyTorch Conv1d weight is (C_out, C_in, k); stored here as (k, C_in, C_out)
        w = 0.2 * jax.random.normal(keys[2 * i], (ksz, c_in, c_out), jnp.float32)
        b = 0.1 * jax.random.normal(keys[2 * i + 1], (c_out,), jnp.float32)
        convs.append((w, b, s, p, d))

    H = channel_sizes[-1]                            # LSTM input == hidden size
    kk = keys[2 * n:]

    def lstm_dir(ka, kb, kc, kd):
        wi = 0.2 * jax.random.normal(ka, (H, 4 * H), jnp.float32)   # W_ih^T
        wh = 0.2 * jax.random.normal(kb, (H, 4 * H), jnp.float32)   # W_hh^T
        b_ih = 0.1 * jax.random.normal(kc, (4 * H,), jnp.float32)
        b_hh = 0.1 * jax.random.normal(kd, (4 * H,), jnp.float32)
        return wi, wh, (b_ih + b_hh).reshape(1, 4 * H)

    wi_f, wh_f, b_f = lstm_dir(kk[0], kk[1], kk[2], kk[3])
    wi_b, wh_b, b_b = lstm_dir(kk[4], kk[5], kk[6], kk[7])
    lstm = dict(wi_f=wi_f, wh_f=wh_f, b_f=b_f,
                wi_b=wi_b, wh_b=wh_b, b_b=b_b)
    return dict(convs=convs, lstm=lstm)


# ----------------------------------------------------------------------------
# Pure-JAX reference.  low_precision=True mirrors the kernel's bf16 matmul
# operand rounding + bf16 gate storage (tight check); False is full f32.
# ----------------------------------------------------------------------------
def reference_forward(params, vis_h, low_precision=False):
    mdt = MATMUL_DTYPE if low_precision else jnp.float32
    gdt = jnp.bfloat16 if low_precision else jnp.float32
    cast = lambda a: a.astype(mdt)

    x = jnp.transpose(vis_h, (0, 2, 1)).astype(jnp.float32)
    for (w, b, s, p, d) in params["convs"]:
        k = w.shape[0]
        L = x.shape[1]
        L_out = (L + 2 * p - d * (k - 1) - 1) // s + 1
        xp = jnp.pad(x, ((0, 0), (p, p), (0, 0)))
        span = (L_out - 1) * s + 1
        acc = jnp.zeros((x.shape[0], L_out, w.shape[2]), jnp.float32)
        for j in range(k):
            xs = xp[:, j * d:j * d + span:s, :]
            acc = acc + jnp.einsum("blc,co->blo", cast(xs), cast(w[j]),
                                   preferred_element_type=jnp.float32)
        x = jnp.maximum(acc + b, 0.0)
    xl = jnp.transpose(x, (1, 0, 2))                 # (L, B, H)
    lp = params["lstm"]
    H = lp["wh_f"].shape[0]

    def run_dir(xs, wi, wh, bias):
        gx = jnp.einsum("lbh,hg->lbg", cast(xs), cast(wi),
                        preferred_element_type=jnp.float32) + bias[0]
        gx = gx.astype(gdt).astype(jnp.float32)

        def step(carry, g_t):
            h, c = carry
            gates = g_t + jnp.dot(cast(h), cast(wh),
                                  preferred_element_type=jnp.float32)
            i = jax.nn.sigmoid(gates[:, :H])
            f = jax.nn.sigmoid(gates[:, H:2 * H])
            g = jnp.tanh(gates[:, 2 * H:3 * H])
            o = jax.nn.sigmoid(gates[:, 3 * H:])
            c = f * c + i * g
            h = o * jnp.tanh(c)
            return (h, c), h

        Bsz = xs.shape[1]
        init = (jnp.zeros((Bsz, H), jnp.float32), jnp.zeros((Bsz, H), jnp.float32))
        _, hs = lax.scan(step, init, gx)
        return hs

    hf = run_dir(xl, lp["wi_f"], lp["wh_f"], lp["b_f"])
    hb = run_dir(xl[::-1], lp["wi_b"], lp["wh_b"], lp["b_b"])[::-1]
    return jnp.transpose(hf, (1, 2, 0)), jnp.transpose(hb, (1, 2, 0))


if __name__ == "__main__":
    key = jax.random.PRNGKey(0)
    B, L = 2, 16
    INPUT_SIZE = 16
    HIDDEN_SIZES = [32, 32]
    KERNEL_SIZES = [3, 3]
    STRIDES = [1, 1]
    PADDINGS = [1, 1]
    DILATIONS = [1, 1]

    k_p, k_ti, k_v = jax.random.split(key, 3)
    params = init_params(k_p, INPUT_SIZE, HIDDEN_SIZES, KERNEL_SIZES,
                         STRIDES, PADDINGS, DILATIONS)
    # Hoisted: weight padding/packing/bf16 cast done once, not per forward.
    prep = prepare_padded_params(params, INPUT_SIZE)

    textual_input = jax.random.normal(k_ti, (B, 8, 32), jnp.float32)
    textual_mask = jnp.ones((B, 8), jnp.float32)
    vis_h = jax.random.normal(k_v, (B, INPUT_SIZE, L), jnp.float32)  # NCL

    out_f, out_b = map_conv_forward(prep, textual_input, textual_mask, vis_h)
    jax.block_until_ready((out_f, out_b))

    assert out_f.shape == (B, HIDDEN_SIZES[-1], L)
    assert out_b.shape == (B, HIDDEN_SIZES[-1], L)

    # Tight check against a precision-matched (bf16 MXU operand) reference,
    # plus a looser sanity bound against the full-f32 reference.
    ref_f_lp, ref_b_lp = reference_forward(params, vis_h, low_precision=True)
    ref_f32, ref_b32 = reference_forward(params, vis_h, low_precision=False)
    err_lp = max(float(jnp.max(jnp.abs(out_f - ref_f_lp))),
                 float(jnp.max(jnp.abs(out_b - ref_b_lp))))
    err_32 = max(float(jnp.max(jnp.abs(out_f - ref_f32))),
                 float(jnp.max(jnp.abs(out_b - ref_b32))))
    assert err_lp < 3e-2, f"precision-matched reference mismatch: {err_lp}"
    assert err_32 < 1.5e-1, f"f32 reference mismatch: {err_32}"

    print("KERNEL_OK")
</pallas_src>

<mosaic_0001>
module attributes {stable_mosaic.version = 11 : i64} {
  func.func @conv_gates_kernel(%arg0: i32, %arg1: memref<16x2x128xf32, #tpu.memory_space<vmem>>, %arg2: memref<3x128x128xbf16, #tpu.memory_space<vmem>>, %arg3: memref<1x128xf32, #tpu.memory_space<vmem>>, %arg4: memref<3x128x128xbf16, #tpu.memory_space<vmem>>, %arg5: memref<1x128xf32, #tpu.memory_space<vmem>>, %arg6: memref<128x1024xbf16, #tpu.memory_space<vmem>>, %arg7: memref<1x1024xf32, #tpu.memory_space<vmem>>, %arg8: memref<16x2x512xbf16, #tpu.memory_space<vmem>>, %arg9: memref<16x2x512xbf16, #tpu.memory_space<vmem>>, %arg10: memref<18x2x128xf32, #tpu.memory_space<vmem>>) attributes {dimension_semantics = [#tpu.dimension_semantics<arbitrary>], iteration_bounds = array<i64: 1>, scalar_prefetch = 0 : i64, scratch_operands = 1 : i64, tpu.core_type = #tpu.core_type<tc>, window_params = [{pipeline_mode = #tpu.pipeline_mode<synchronous>, transform_indices = @transform_0, window_bounds = array<i64: 16, 2, 128>}, {pipeline_mode = #tpu.pipeline_mode<synchronous>, transform_indices = @transform_1, window_bounds = array<i64: 3, 128, 128>}, {pipeline_mode = #tpu.pipeline_mode<synchronous>, transform_indices = @transform_2, window_bounds = array<i64: 1, 128>}, {pipeline_mode = #tpu.pipeline_mode<synchronous>, transform_indices = @transform_3, window_bounds = array<i64: 3, 128, 128>}, {pipeline_mode = #tpu.pipeline_mode<synchronous>, transform_indices = @transform_4, window_bounds = array<i64: 1, 128>}, {pipeline_mode = #tpu.pipeline_mode<synchronous>, transform_indices = @transform_5, window_bounds = array<i64: 128, 1024>}, {pipeline_mode = #tpu.pipeline_mode<synchronous>, transform_indices = @transform_6, window_bounds = array<i64: 1, 1024>}, {pipeline_mode = #tpu.pipeline_mode<synchronous>, transform_indices = @transform_7, window_bounds = array<i64: 16, 2, 512>}, {pipeline_mode = #tpu.pipeline_mode<synchronous>, transform_indices = @transform_8, window_bounds = array<i64: 16, 2, 512>}]} {
    %c0 = arith.constant 0 : index
    %c0_0 = arith.constant 0 : index
    %c0_1 = arith.constant 0 : index
    %0 = vector.load %arg1[%c0, %c0_0, %c0_1] : memref<16x2x128xf32, #tpu.memory_space<vmem>>, vector<16x2x128xf32>
    %cst = arith.constant 0.000000e+00 : f32
    %1 = vector.broadcast %cst : f32 to vector<1x2x128xf32>
    %c0_2 = arith.constant 0 : index
    %c0_3 = arith.constant 0 : index
    %c0_4 = arith.constant 0 : index
    %2 = vector.load %arg10[%c0_2, %c0_3, %c0_4] : memref<18x2x128xf32, #tpu.memory_space<vmem>>, vector<1x2x128xf32>
    tpu.vector_store %arg10[%c0_2, %c0_3, %c0_4], %1 {strides = array<i32>} : memref<18x2x128xf32, #tpu.memory_space<vmem>>, vector<1x2x128xf32>,
    %c17 = arith.constant 17 : index
    %c0_5 = arith.constant 0 : index
    %c0_6 = arith.constant 0 : index
    %3 = vector.load %arg10[%c17, %c0_5, %c0_6] : memref<18x2x128xf32, #tpu.memory_space<vmem>>, vector<1x2x128xf32>
    tpu.vector_store %arg10[%c17, %c0_5, %c0_6], %1 {strides = array<i32>} : memref<18x2x128xf32, #tpu.memory_space<vmem>>, vector<1x2x128xf32>,
    %c1 = arith.constant 1 : index
    %c0_7 = arith.constant 0 : index
    %c0_8 = arith.constant 0 : index
    %4 = vector.load %arg10[%c1, %c0_7, %c0_8] : memref<18x2x128xf32, #tpu.memory_space<vmem>>, vector<16x2x128xf32>
    tpu.vector_store %arg10[%c1, %c0_7, %c0_8], %0 {strides = array<i32>} : memref<18x2x128xf32, #tpu.memory_space<vmem>>, vector<16x2x128xf32>,
    %c0_9 = arith.constant 0 : index
    %c0_10 = arith.constant 0 : index
    %c0_11 = arith.constant 0 : index
    %5 = vector.load %arg10[%c0_9, %c0_10, %c0_11] : memref<18x2x128xf32, #tpu.memory_space<vmem>>, vector<18x2x128xf32>
    %cst_12 = arith.constant 0.000000e+00 : f32
    %6 = vector.broadcast %cst_12 : f32 to vector<32x128xf32>
    %7 = vector.extract_strided_slice %5 {offsets = [0, 0, 0], sizes = [16, 2, 128], strides = [1, 1, 1]} : vector<18x2x128xf32> to vector<16x2x128xf32>
    %8 = vector.shape_cast %7 : vector<16x2x128xf32> to vector<32x128xf32>
    %9 = arith.truncf %8 : vector<32x128xf32> to vector<32x128xbf16>
    %c0_13 = arith.constant 0 : index
    %c0_14 = arith.constant 0 : index
    %c0_15 = arith.constant 0 : index
    %10 = vector.load %arg2[%c0_13, %c0_14, %c0_15] : memref<3x128x128xbf16, #tpu.memory_space<vmem>>, vector<1x128x128xbf16>
    %11 = vector.shape_cast %10 : vector<1x128x128xbf16> to vector<128x128xbf16>
    %cst_16 = arith.constant dense<0.000000e+00> : vector<32x128xf32>
    %12 = tpu.matmul %9, %11, %cst_16 {dimension_numbers = #tpu.dot_dimension_numbers<[1], [0], [0], [1], [0, 0, 1, 1], [], []>} : vector<32x128xbf16>, vector<128x128xbf16>, vector<32x128xf32> -> vector<32x128xf32>
    %13 = arith.addf %6, %12 : vector<32x128xf32>
    %14 = vector.extract_strided_slice %5 {offsets = [1, 0, 0], sizes = [16, 2, 128], strides = [1, 1, 1]} : vector<18x2x128xf32> to vector<16x2x128xf32>
    %15 = vector.shape_cast %14 : vector<16x2x128xf32> to vector<32x128xf32>
    %16 = arith.truncf %15 : vector<32x128xf32> to vector<32x128xbf16>
    %c1_17 = arith.constant 1 : index
    %c0_18 = arith.constant 0 : index
    %c0_19 = arith.constant 0 : index
    %17 = vector.load %arg2[%c1_17, %c0_18, %c0_19] : memref<3x128x128xbf16, #tpu.memory_space<vmem>>, vector<1x128x128xbf16>
    %18 = vector.shape_cast %17 : vector<1x128x128xbf16> to vector<128x128xbf16>
    %cst_20 = arith.constant dense<0.000000e+00> : vector<32x128xf32>
    %19 = tpu.matmul %16, %18, %cst_20 {dimension_numbers = #tpu.dot_dimension_numbers<[1], [0], [0], [1], [0, 0, 1, 1], [], []>} : vector<32x128xbf16>, vector<128x128xbf16>, vector<32x128xf32> -> vector<32x128xf32>
    %20 = arith.addf %13, %19 : vector<32x128xf32>
    %21 = vector.extract_strided_slice %5 {offsets = [2, 0, 0], sizes = [16, 2, 128], strides = [1, 1, 1]} : vector<18x2x128xf32> to vector<16x2x128xf32>
    %22 = vector.shape_cast %21 : vector<16x2x128xf32> to vector<32x128xf32>
    %23 = arith.truncf %22 : vector<32x128xf32> to vector<32x128xbf16>
    %c2 = arith.constant 2 : index
    %c0_21 = arith.constant 0 : index
    %c0_22 = arith.constant 0 : index
    %24 = vector.load %arg2[%c2, %c0_21, %c0_22] : memref<3x128x128xbf16, #tpu.memory_space<vmem>>, vector<1x128x128xbf16>
    %25 = vector.shape_cast %24 : vector<1x128x128xbf16> to vector<128x128xbf16>
    %cst_23 = arith.constant dense<0.000000e+00> : vector<32x128xf32>
    %26 = tpu.matmul %23, %25, %cst_23 {dimension_numbers = #tpu.dot_dimension_numbers<[1], [0], [0], [1], [0, 0, 1, 1], [], []>} : vector<32x128xbf16>, vector<128x128xbf16>, vector<32x128xf32> -> vector<32x128xf32>
    %27 = arith.addf %20, %26 : vector<32x128xf32>
    %c0_24 = arith.constant 0 : index
    %c0_25 = arith.constant 0 : index
    %28 = vector.load %arg3[%c0_24, %c0_25] : memref<1x128xf32, #tpu.memory_space<vmem>>, vector<1x128xf32>
    %29 = vector.broadcast %28 : vector<1x128xf32> to vector<32x128xf32>
    %30 = arith.addf %27, %29 : vector<32x128xf32>
    %cst_26 = arith.constant 0.000000e+00 : f32
    %31 = vector.broadcast %cst_26 : f32 to vector<32x128xf32>
    %32 = arith.maximumf %30, %31 : vector<32x128xf32>
    %33 = vector.shape_cast %32 : vector<32x128xf32> to vector<16x2x128xf32>
    %cst_27 = arith.constant 0.000000e+00 : f32
    %34 = vector.broadcast %cst_27 : f32 to vector<1x2x128xf32>
    %c0_28 = arith.constant 0 : index
    %c0_29 = arith.constant 0 : index
    %c0_30 = arith.constant 0 : index
    %35 = vector.load %arg10[%c0_28, %c0_29, %c0_30] : memref<18x2x128xf32, #tpu.memory_space<vmem>>, vector<1x2x128xf32>
    tpu.vector_store %arg10[%c0_28, %c0_29, %c0_30], %34 {strides = array<i32>} : memref<18x2x128xf32, #tpu.memory_space<vmem>>, vector<1x2x128xf32>,
    %c17_31 = arith.constant 17 : index
    %c0_32 = arith.constant 0 : index
    %c0_33 = arith.constant 0 : index
    %36 = vector.load %arg10[%c17_31, %c0_32, %c0_33] : memref<18x2x128xf32, #tpu.memory_space<vmem>>, vector<1x2x128xf32>
    tpu.vector_store %arg10[%c17_31, %c0_32, %c0_33], %34 {strides = array<i32>} : memref<18x2x128xf32, #tpu.memory_space<vmem>>, vector<1x2x128xf32>,
    %c1_34 = arith.constant 1 : index
    %c0_35 = arith.constant 0 : index
    %c0_36 = arith.constant 0 : index
    %37 = vector.load %arg10[%c1_34, %c0_35, %c0_36] : memref<18x2x128xf32, #tpu.memory_space<vmem>>, vector<16x2x128xf32>
    tpu.vector_store %arg10[%c1_34, %c0_35, %c0_36], %33 {strides = array<i32>} : memref<18x2x128xf32, #tpu.memory_space<vmem>>, vector<16x2x128xf32>,
    %c0_37 = arith.constant 0 : index
    %c0_38 = arith.constant 0 : index
    %c0_39 = arith.constant 0 : index
    %38 = vector.load %arg10[%c0_37, %c0_38, %c0_39] : memref<18x2x128xf32, #tpu.memory_space<vmem>>, vector<18x2x128xf32>
    %cst_40 = arith.constant 0.000000e+00 : f32
    %39 = vector.broadcast %cst_40 : f32 to vector<32x128xf32>
    %40 = vector.extract_strided_slice %38 {offsets = [0, 0, 0], sizes = [16, 2, 128], strides = [1, 1, 1]} : vector<18x2x128xf32> to vector<16x2x128xf32>
    %41 = vector.shape_cast %40 : vector<16x2x128xf32> to vector<32x128xf32>
    %42 = arith.truncf %41 : vector<32x128xf32> to vector<32x128xbf16>
    %c0_41 = arith.constant 0 : index
    %c0_42 = arith.constant 0 : index
    %c0_43 = arith.constant 0 : index
    %43 = vector.load %arg4[%c0_41, %c0_42, %c0_43] : memref<3x128x128xbf16, #tpu.memory_space<vmem>>, vector<1x128x128xbf16>
    %44 = vector.shape_cast %43 : vector<1x128x128xbf16> to vector<128x128xbf16>
    %cst_44 = arith.constant dense<0.000000e+00> : vector<32x128xf32>
    %45 = tpu.matmul %42, %44, %cst_44 {dimension_numbers = #tpu.dot_dimension_numbers<[1], [0], [0], [1], [0, 0, 1, 1], [], []>} : vector<32x128xbf16>, vector<128x128xbf16>, vector<32x128xf32> -> vector<32x128xf32>
    %46 = arith.addf %39, %45 : vector<32x128xf32>
    %47 = vector.extract_strided_slice %38 {offsets = [1, 0, 0], sizes = [16, 2, 128], strides = [1, 1, 1]} : vector<18x2x128xf32> to vector<16x2x128xf32>
    %48 = vector.shape_cast %47 : vector<16x2x128xf32> to vector<32x128xf32>
    %49 = arith.truncf %48 : vector<32x128xf32> to vector<32x128xbf16>
    %c1_45 = arith.constant 1 : index
    %c0_46 = arith.constant 0 : index
    %c0_47 = arith.constant 0 : index
    %50 = vector.load %arg4[%c1_45, %c0_46, %c0_47] : memref<3x128x128xbf16, #tpu.memory_space<vmem>>, vector<1x128x128xbf16>
    %51 = vector.shape_cast %50 : vector<1x128x128xbf16> to vector<128x128xbf16>
    %cst_48 = arith.constant dense<0.000000e+00> : vector<32x128xf32>
    %52 = tpu.matmul %49, %51, %cst_48 {dimension_numbers = #tpu.dot_dimension_numbers<[1], [0], [0], [1], [0, 0, 1, 1], [], []>} : vector<32x128xbf16>, vector<128x128xbf16>, vector<32x128xf32> -> vector<32x128xf32>
    %53 = arith.addf %46, %52 : vector<32x128xf32>
    %54 = vector.extract_strided_slice %38 {offsets = [2, 0, 0], sizes = [16, 2, 128], strides = [1, 1, 1]} : vector<18x2x128xf32> to vector<16x2x128xf32>
    %55 = vector.shape_cast %54 : vector<16x2x128xf32> to vector<32x128xf32>
    %56 = arith.truncf %55 : vector<32x128xf32> to vector<32x128xbf16>
    %c2_49 = arith.constant 2 : index
    %c0_50 = arith.constant 0 : index
    %c0_51 = arith.constant 0 : index
    %57 = vector.load %arg4[%c2_49, %c0_50, %c0_51] : memref<3x128x128xbf16, #tpu.memory_space<vmem>>, vector<1x128x128xbf16>
    %58 = vector.shape_cast %57 : vector<1x128x128xbf16> to vector<128x128xbf16>
    %cst_52 = arith.constant dense<0.000000e+00> : vector<32x128xf32>
    %59 = tpu.matmul %56, %58, %cst_52 {dimension_numbers = #tpu.dot_dimension_numbers<[1], [0], [0], [1], [0, 0, 1, 1], [], []>} : vector<32x128xbf16>, vector<128x128xbf16>, vector<32x128xf32> -> vector<32x128xf32>
    %60 = arith.addf %53, %59 : vector<32x128xf32>
    %c0_53 = arith.constant 0 : index
    %c0_54 = arith.constant 0 : index
    %61 = vector.load %arg5[%c0_53, %c0_54] : memref<1x128xf32, #tpu.memory_space<vmem>>, vector<1x128xf32>
    %62 = vector.broadcast %61 : vector<1x128xf32> to vector<32x128xf32>
    %63 = arith.addf %60, %62 : vector<32x128xf32>
    %cst_55 = arith.constant 0.000000e+00 : f32
    %64 = vector.broadcast %cst_55 : f32 to vector<32x128xf32>
    %65 = arith.maximumf %63, %64 : vector<32x128xf32>
    %66 = vector.shape_cast %65 : vector<32x128xf32> to vector<16x2x128xf32>
    %67 = vector.shape_cast %66 : vector<16x2x128xf32> to vector<32x128xf32>
    %68 = arith.truncf %67 : vector<32x128xf32> to vector<32x128xbf16>
    %c0_56 = arith.constant 0 : index
    %c0_57 = arith.constant 0 : index
    %69 = vector.load %arg6[%c0_56, %c0_57] : memref<128x1024xbf16, #tpu.memory_space<vmem>>, vector<128x1024xbf16>
    %cst_58 = arith.constant dense<0.000000e+00> : vector<32x1024xf32>
    %70 = tpu.matmul %68, %69, %cst_58 {dimension_numbers = #tpu.dot_dimension_numbers<[1], [0], [0], [1], [0, 0, 1, 1], [], []>} : vector<32x128xbf16>, vector<128x1024xbf16>, vector<32x1024xf32> -> vector<32x1024xf32>
    %c0_59 = arith.constant 0 : index
    %c0_60 = arith.constant 0 : index
    %71 = vector.load %arg7[%c0_59, %c0_60] : memref<1x1024xf32, #tpu.memory_space<vmem>>, vector<1x1024xf32>
    %72 = vector.broadcast %71 : vector<1x1024xf32> to vector<32x1024xf32>
    %73 = arith.addf %70, %72 : vector<32x1024xf32>
    %74 = vector.shape_cast %73 : vector<32x1024xf32> to vector<16x2x1024xf32>
    %75 = vector.extract_strided_slice %74 {offsets = [0, 0, 0], sizes = [16, 2, 512], strides = [1, 1, 1]} : vector<16x2x1024xf32> to vector<16x2x512xf32>
    %76 = arith.truncf %75 : vector<16x2x512xf32> to vector<16x2x512xbf16>
    %c0_61 = arith.constant 0 : index
    %c0_62 = arith.constant 0 : index
    %c0_63 = arith.constant 0 : index
    %77 = vector.load %arg8[%c0_61, %c0_62, %c0_63] : memref<16x2x512xbf16, #tpu.memory_space<vmem>>, vector<16x2x512xbf16>
    tpu.vector_store %arg8[%c0_61, %c0_62, %c0_63], %76 {strides = array<i32>} : memref<16x2x512xbf16, #tpu.memory_space<vmem>>, vector<16x2x512xbf16>,
    %78 = vector.extract_strided_slice %74 {offsets = [0, 0, 512], sizes = [16, 2, 512], strides = [1, 1, 1]} : vector<16x2x1024xf32> to vector<16x2x512xf32>
    %79 = arith.truncf %78 : vector<16x2x512xf32> to vector<16x2x512xbf16>
    %c0_64 = arith.constant 0 : index
    %c0_65 = arith.constant 0 : index
    %c0_66 = arith.constant 0 : index
    %80 = vector.load %arg9[%c0_64, %c0_65, %c0_66] : memref<16x2x512xbf16, #tpu.memory_space<vmem>>, vector<16x2x512xbf16>
    tpu.vector_store %arg9[%c0_64, %c0_65, %c0_66], %79 {strides = array<i32>} : memref<16x2x512xbf16, #tpu.memory_space<vmem>>, vector<16x2x512xbf16>,
    return
  }
  func.func @transform_0(%arg0: i32) -> (i32, i32, i32) {
    %c0_i32 = arith.constant 0 : i32
    %c0_i32_0 = arith.constant 0 : i32
    %c0_i32_1 = arith.constant 0 : i32
    %c0_i32_2 = arith.constant 0 : i32
    return %c0_i32, %c0_i32_0, %c0_i32_1 : i32, i32, i32
  }
  func.func @transform_1(%arg0: i32) -> (i32, i32, i32) {
    %c0_i32 = arith.constant 0 : i32
    %c0_i32_0 = arith.constant 0 : i32
    %c0_i32_1 = arith.constant 0 : i32
    %c0_i32_2 = arith.constant 0 : i32
    return %c0_i32, %c0_i32_0, %c0_i32_1 : i32, i32, i32
  }
  func.func @transform_2(%arg0: i32) -> (i32, i32) {
    %c0_i32 = arith.constant 0 : i32
    %c0_i32_0 = arith.constant 0 : i32
    %c0_i32_1 = arith.constant 0 : i32
    return %c0_i32, %c0_i32_0 : i32, i32
  }
  func.func @transform_3(%arg0: i32) -> (i32, i32, i32) {
    %c0_i32 = arith.constant 0 : i32
    %c0_i32_0 = arith.constant 0 : i32
    %c0_i32_1 = arith.constant 0 : i32
    %c0_i32_2 = arith.constant 0 : i32
    return %c0_i32, %c0_i32_0, %c0_i32_1 : i32, i32, i32
  }
  func.func @transform_4(%arg0: i32) -> (i32, i32) {
    %c0_i32 = arith.constant 0 : i32
    %c0_i32_0 = arith.constant 0 : i32
    %c0_i32_1 = arith.constant 0 : i32
    return %c0_i32, %c0_i32_0 : i32, i32
  }
  func.func @transform_5(%arg0: i32) -> (i32, i32) {
    %c0_i32 = arith.constant 0 : i32
    %c0_i32_0 = arith.constant 0 : i32
    %c0_i32_1 = arith.constant 0 : i32
    return %c0_i32, %c0_i32_0 : i32, i32
  }
  func.func @transform_6(%arg0: i32) -> (i32, i32) {
    %c0_i32 = arith.constant 0 : i32
    %c0_i32_0 = arith.constant 0 : i32
    %c0_i32_1 = arith.constant 0 : i32
    return %c0_i32, %c0_i32_0 : i32, i32
  }
  func.func @transform_7(%arg0: i32) -> (i32, i32, i32) {
    %c0_i32 = arith.constant 0 : i32
    %c0_i32_0 = arith.constant 0 : i32
    %c0_i32_1 = arith.constant 0 : i32
    %c0_i32_2 = arith.constant 0 : i32
    return %c0_i32, %c0_i32_0, %c0_i32_1 : i32, i32, i32
  }
  func.func @transform_8(%arg0: i32) -> (i32, i32, i32) {
    %c0_i32 = arith.constant 0 : i32
    %c0_i32_0 = arith.constant 0 : i32
    %c0_i32_1 = arith.constant 0 : i32
    %c0_i32_2 = arith.constant 0 : i32
    return %c0_i32, %c0_i32_0, %c0_i32_1 : i32, i32, i32
  }
}

</mosaic_0001>

<llo_original>
// kernel: tpu_custom_call.1
$region0: #{tpu_custom_call.1}
  #allocation0 [shape = 'u32[]', space=smem, size = 0x4, offset = 0x4, fixed_abs, tag = 'smem constant byte address 0x4 - core index']
  #allocation1 [shape = 'u32[72,128]{1,0:T(1,128)}', space=vmem, size = 0x9000, scoped, tag = 'internal scratch']
  #allocation2 [shape = 'f32[18,2,128]{2,1,0:T(2,128)}', space=vmem, size = 0x4800, scoped, tag = 'scratch operand']
  %s0 = inlined_call_operand.hbm [shape: f32[16,2,128], index: 0, kind: input, shape index: {}]
  %s1 = inlined_call_operand.hbm [shape: bf16[3,128,128], index: 1, kind: input, shape index: {}]
  %s2 = inlined_call_operand.vmem [shape: f32[1,128], index: 2, kind: input, shape index: {}]
  %s3 = inlined_call_operand.hbm [shape: bf16[3,128,128], index: 3, kind: input, shape index: {}]
  %s4 = inlined_call_operand.vmem [shape: f32[1,128], index: 4, kind: input, shape index: {}]
  %s5 = inlined_call_operand.hbm [shape: bf16[128,1024], index: 5, kind: input, shape index: {}]
  %s6 = inlined_call_operand.hbm [shape: f32[1,1024], index: 6, kind: input, shape index: {}]
  %s7 = inlined_call_operand.hbm [shape: bf16[16,2,512], index: 7, kind: output, shape index: {0}]
  %s8 = inlined_call_operand.hbm [shape: bf16[16,2,512], index: 8, kind: output, shape index: {1}]
  %9 = xla_tuple %s7, %s8
  %s10 = sld [smem:[#allocation0]]
  $region66: #{tpu_custom_call.1} parent=0
    _
  %s12 = ssub.s32 1, %s10
  %s13 = scalar_select 0, %s12, %s10
  $region1: #{tpu_custom_call.1} parent=0
    #allocation3 [shape = 'u8[16384]{0}', space=vmem, size = 0x4000, scoped, tag = 'input window, operand 0, single buffered']
    #allocation4 [shape = 's32[1]{0}', space=sflag, size = 0x4, scoped, tag = 'scoped memory for tpu_custom_call.1']
    #allocation5 [shape = 's32[1]{0}', space=sflag, size = 0x4, scoped, tag = 'scoped memory for tpu_custom_call.1']
    #allocation6 [shape = 'u8[98304]{0}', space=vmem, size = 0x18000, scoped, tag = 'input window, operand 1, single buffered']
    #allocation7 [shape = 's32[1]{0}', space=sflag, size = 0x4, scoped, tag = 'scoped memory for tpu_custom_call.1']
    #allocation8 [shape = 'u8[98304]{0}', space=vmem, size = 0x18000, scoped, tag = 'input window, operand 3, single buffered']
    #allocation9 [shape = 'u8[262144]{0}', space=vmem, size = 0x40000, scoped, tag = 'input window, operand 5, single buffered']
    #allocation10 [shape = 's32[1]{0}', space=sflag, size = 0x4, scoped, tag = 'scoped memory for tpu_custom_call.1']
    #allocation11 [shape = 'u8[4096]{0}', space=vmem, size = 0x1000, scoped, tag = 'input window, operand 6, single buffered']
    #allocation12 [shape = 'u8[32768]{0}', space=vmem, size = 0x8000, scoped, tag = 'output window, operand 0, single buffered']
    #allocation13 [shape = 'u8[32768]{0}', space=vmem, size = 0x8000, scoped, tag = 'output window, operand 1, single buffered']
    #allocation14 [shape = 's32[1]{0}', space=sflag, size = 0x4, scoped, tag = 'scoped memory for tpu_custom_call.1']
    %14 = vsyncpa [#allocation4], 0
    %15 = vsyncpa [#allocation7], 0
    %16 = vsyncpa [#allocation10], 0
    %17 = vsyncpa [#allocation5], 0
    %18 = vsyncpa [#allocation14], 0
    // Predicated region
    $region2: #{tpu_custom_call.1} parent=1 // pred_check
      _
    $region3: #{tpu_custom_call.1} parent=1 // pred_check_branch
      %20 = sbr.rel (0) target = $region5
    $region4: #{tpu_custom_call.1} parent=1 // pred_region
      %22 = vsyncadd [#allocation4], 0
      %s23 = sshll.u32 %s0, 4
      %s24 = int_to_ptr.hbm [resolvable:$true] %s23
      %s25 = sshll.u32 [#allocation3], 4
      %s26 = int_to_ptr.vmem [resolvable:$true] %s25
      %31 = dma.hbm_to_vmem [thread:$0]  %s24, 512, %s26, [#allocation4], 32, 32, 2
    $region5: #{tpu_custom_call.1} parent=1 // pred_fallthru
      _
    // Predicated region
    $region6: #{tpu_custom_call.1} parent=1 // pred_check
      _
    $region7: #{tpu_custom_call.1} parent=1 // pred_check_branch
      %33 = sbr.rel (0) target = $region9
    $region8: #{tpu_custom_call.1} parent=1 // pred_region
      %35 = vsyncadd [#allocation7], 0
      %s36 = sshll.u32 %s1, 4
      %s37 = int_to_ptr.hbm [resolvable:$true] %s36
      %s38 = sshll.u32 [#allocation6], 4
      %s39 = int_to_ptr.vmem [resolvable:$true] %s38
      %44 = dma.hbm_to_vmem [thread:$0]  %s37, 3072, %s39, [#allocation7], 64, 64, 4
    $region9: #{tpu_custom_call.1} parent=1 // pred_fallthru
      _
    // Predicated region
    $region10: #{tpu_custom_call.1} parent=1 // pred_check
      _
    $region11: #{tpu_custom_call.1} parent=1 // pred_check_branch
      %46 = sbr.rel (0) target = $region13
    $region12: #{tpu_custom_call.1} parent=1 // pred_region
      _
    $region13: #{tpu_custom_call.1} parent=1 // pred_fallthru
      _
    // Predicated region
    $region14: #{tpu_custom_call.1} parent=1 // pred_check
      _
    $region15: #{tpu_custom_call.1} parent=1 // pred_check_branch
      %48 = sbr.rel (0) target = $region17
    $region16: #{tpu_custom_call.1} parent=1 // pred_region
      %50 = vsyncadd [#allocation7], 0
      %s51 = sshll.u32 %s3, 4
      %s52 = int_to_ptr.hbm [resolvable:$true] %s51
      %s53 = sshll.u32 [#allocation8], 4
      %s54 = int_to_ptr.vmem [resolvable:$true] %s53
      %59 = dma.hbm_to_vmem [thread:$0]  %s52, 3072, %s54, [#allocation7], 64, 64, 4
    $region17: #{tpu_custom_call.1} parent=1 // pred_fallthru
      _
    // Predicated region
    $region18: #{tpu_custom_call.1} parent=1 // pred_check
      _
    $region19: #{tpu_custom_call.1} parent=1 // pred_check_branch
      %61 = sbr.rel (0) target = $region21
    $region20: #{tpu_custom_call.1} parent=1 // pred_region
      _
    $region21: #{tpu_custom_call.1} parent=1 // pred_fallthru
      _
    // Predicated region
    $region22: #{tpu_custom_call.1} parent=1 // pred_check
      _
    $region23: #{tpu_custom_call.1} parent=1 // pred_check_branch
      %63 = sbr.rel (0) target = $region25
    $region24: #{tpu_custom_call.1} parent=1 // pred_region
      %65 = vsyncadd [#allocation10], 0
      %s66 = sshll.u32 %s5, 4
      %s67 = int_to_ptr.hbm [resolvable:$true] %s66
      %s68 = sshll.u32 [#allocation9], 4
      %s69 = int_to_ptr.vmem [resolvable:$true] %s68
      %74 = dma.hbm_to_vmem [thread:$0]  %s67, 8192, %s69, [#allocation10], 512, 512, 32
    $region25: #{tpu_custom_call.1} parent=1 // pred_fallthru
      _
    // Predicated region
    $region26: #{tpu_custom_call.1} parent=1 // pred_check
      _
    $region27: #{tpu_custom_call.1} parent=1 // pred_check_branch
      %76 = sbr.rel (0) target = $region29
    $region28: #{tpu_custom_call.1} parent=1 // pred_region
      %78 = vsyncadd [#allocation10], 0
      %s80 = sshll.u32 %s6, 4
      %s81 = int_to_ptr.hbm [resolvable:$true] %s80
      %s82 = sshll.u32 [#allocation11], 4
      %s83 = int_to_ptr.vmem [resolvable:$true] %s82
      %85 = dma.hbm_to_vmem [thread:$0]  %s81, 128, %s83, [#allocation10]
    $region29: #{tpu_custom_call.1} parent=1 // pred_fallthru
      _
    // Predicated region
    $region30: #{tpu_custom_call.1} parent=1 // pred_check
      _
    $region31: #{tpu_custom_call.1} parent=1 // pred_check_branch
      %87 = sbr.rel (0) target = $region33
    $region32: #{tpu_custom_call.1} parent=1 // pred_region
      %89 = dma.done [#allocation4], 512
    $region33: #{tpu_custom_call.1} parent=1 // pred_fallthru
      _
    // Predicated region
    $region34: #{tpu_custom_call.1} parent=1 // pred_check
      _
    $region35: #{tpu_custom_call.1} parent=1 // pred_check_branch
      %91 = sbr.rel (0) target = $region37
    $region36: #{tpu_custom_call.1} parent=1 // pred_region
      %93 = dma.done [#allocation7], 3072
    $region37: #{tpu_custom_call.1} parent=1 // pred_fallthru
      _
    // Predicated region
    $region38: #{tpu_custom_call.1} parent=1 // pred_check
      _
    $region39: #{tpu_custom_call.1} parent=1 // pred_check_branch
      %95 = sbr.rel (0) target = $region41
    $region40: #{tpu_custom_call.1} parent=1 // pred_region
      %97 = dma.done [#allocation7], 3072
    $region41: #{tpu_custom_call.1} parent=1 // pred_fallthru
      _
    // Predicated region
    $region42: #{tpu_custom_call.1} parent=1 // pred_check
      _
    $region43: #{tpu_custom_call.1} parent=1 // pred_check_branch
      %99 = sbr.rel (0) target = $region45
    $region44: #{tpu_custom_call.1} parent=1 // pred_region
      %101 = dma.done [#allocation10], 8192
    $region45: #{tpu_custom_call.1} parent=1 // pred_fallthru
      _
    // Predicated region
    $region46: #{tpu_custom_call.1} parent=1 // pred_check
      _
    $region47: #{tpu_custom_call.1} parent=1 // pred_check_branch
      %103 = sbr.rel (0) target = $region49
    $region48: #{tpu_custom_call.1} parent=1 // pred_region
      %105 = dma.done [#allocation10], 128
    $region49: #{tpu_custom_call.1} parent=1 // pred_fallthru
      _
    %v106 = vld [vmem:[#allocation3] sm:$0x3]
    %v107 = vld [vmem:[#allocation3 + $0x2] sm:$0x3]
    %v108 = vld [vmem:[#allocation3 + $0x4] sm:$0x3]
    %v109 = vld [vmem:[#allocation3 + $0x6] sm:$0x3]
    %v110 = vld [vmem:[#allocation3 + $0x8] sm:$0x3]
    %v111 = vld [vmem:[#allocation3 + $0xa] sm:$0x3]
    %v112 = vld [vmem:[#allocation3 + $0xc] sm:$0x3]
    %v113 = vld [vmem:[#allocation3 + $0xe] sm:$0x3]
    %v114 = vld [vmem:[#allocation3 + $0x10] sm:$0x3]
    %v115 = vld [vmem:[#allocation3 + $0x12] sm:$0x3]
    %v116 = vld [vmem:[#allocation3 + $0x14] sm:$0x3]
    %v117 = vld [vmem:[#allocation3 + $0x16] sm:$0x3]
    %v118 = vld [vmem:[#allocation3 + $0x18] sm:$0x3]
    %v119 = vld [vmem:[#allocation3 + $0x1a] sm:$0x3]
    %v120 = vld [vmem:[#allocation3 + $0x1c] sm:$0x3]
    %v121 = vld [vmem:[#allocation3 + $0x1e] sm:$0x3]
    %122 = vst [vmem:[#allocation2] sm:$0x3] 0.0
    %s123 = scalar_lea.vmem [#allocation2], 34
    %124 = vst [vmem:[%s123] sm:$0x3] 0.0
    %s125 = scalar_lea.vmem [#allocation2], 2
    %126 = vst [vmem:[%s125] sm:$0x3] %v106
    %127 = vst [vmem:[%s125 + $0x2] sm:$0x3] %v107
    %128 = vst [vmem:[%s125 + $0x4] sm:$0x3] %v108
    %129 = vst [vmem:[%s125 + $0x6] sm:$0x3] %v109
    %130 = vst [vmem:[%s125 + $0x8] sm:$0x3] %v110
    %131 = vst [vmem:[%s125 + $0xa] sm:$0x3] %v111
    %132 = vst [vmem:[%s125 + $0xc] sm:$0x3] %v112
    %133 = vst [vmem:[%s125 + $0xe] sm:$0x3] %v113
    %134 = vst [vmem:[%s125 + $0x10] sm:$0x3] %v114
    %135 = vst [vmem:[%s125 + $0x12] sm:$0x3] %v115
    %136 = vst [vmem:[%s125 + $0x14] sm:$0x3] %v116
    %137 = vst [vmem:[%s125 + $0x16] sm:$0x3] %v117
    %138 = vst [vmem:[%s125 + $0x18] sm:$0x3] %v118
    %139 = vst [vmem:[%s125 + $0x1a] sm:$0x3] %v119
    %140 = vst [vmem:[%s125 + $0x1c] sm:$0x3] %v120
    %141 = vst [vmem:[%s125 + $0x1e] sm:$0x3] %v121
    %v142 = vld [vmem:[#allocation2] sm:$0x3]
    %v143 = vld [vmem:[#allocation2 + $0x2] sm:$0x3]
    %v144 = vld [vmem:[#allocation2 + $0x4] sm:$0x3]
    %v145 = vld [vmem:[#allocation2 + $0x6] sm:$0x3]
    %v146 = vld [vmem:[#allocation2 + $0x8] sm:$0x3]
    %v147 = vld [vmem:[#allocation2 + $0xa] sm:$0x3]
    %v148 = vld [vmem:[#allocation2 + $0xc] sm:$0x3]
    %v149 = vld [vmem:[#allocation2 + $0xe] sm:$0x3]
    %v150 = vld [vmem:[#allocation2 + $0x10] sm:$0x3]
    %v151 = vld [vmem:[#allocation2 + $0x12] sm:$0x3]
    %v152 = vld [vmem:[#allocation2 + $0x14] sm:$0x3]
    %v153 = vld [vmem:[#allocation2 + $0x16] sm:$0x3]
    %v154 = vld [vmem:[#allocation2 + $0x18] sm:$0x3]
    %v155 = vld [vmem:[#allocation2 + $0x1a] sm:$0x3]
    %v156 = vld [vmem:[#allocation2 + $0x1c] sm:$0x3]
    %v157 = vld [vmem:[#allocation2 + $0x1e] sm:$0x3]
    %v158 = vld [vmem:[#allocation2 + $0x20] sm:$0x3]
    %v159 = vld [vmem:[#allocation2 + $0x22] sm:$0x3]
    %176 = vst [vmem:[#allocation1] ss:$4 sm:$0xff] %v142
    %s177 = scalar_lea.vmem [#allocation1], 1
    %178 = vst [vmem:[%s177] ss:$4 sm:$0xff] %v143
    %s179 = scalar_lea.vmem [#allocation1], 2
    %180 = vst [vmem:[%s179] ss:$4 sm:$0xff] %v144
    %s181 = scalar_lea.vmem [#allocation1], 3
    %182 = vst [vmem:[%s181] ss:$4 sm:$0xff] %v145
    %s183 = scalar_lea.vmem [#allocation1], 32
    %184 = vst [vmem:[%s183] ss:$4 sm:$0xff] %v146
    %s185 = scalar_lea.vmem [#allocation1], 33
    %186 = vst [vmem:[%s185] ss:$4 sm:$0xff] %v147
    %s187 = scalar_lea.vmem [#allocation1], 34
    %188 = vst [vmem:[%s187] ss:$4 sm:$0xff] %v148
    %s189 = scalar_lea.vmem [#allocation1], 35
    %190 = vst [vmem:[%s189] ss:$4 sm:$0xff] %v149
    %v191 = vld.sshfl [vmem:[#allocation1] sm:$0xff pattern:$0x73625140]
    %v192 = vld.sshfl [vmem:[#allocation1 + $0x20] sm:$0xff pattern:$0x73625140]
    %193 = vst [vmem:[#allocation1] ss:$4 sm:$0xff] %v150
    %194 = vst [vmem:[%s177] ss:$4 sm:$0xff] %v151
    %195 = vst [vmem:[%s179] ss:$4 sm:$0xff] %v152
    %196 = vst [vmem:[%s181] ss:$4 sm:$0xff] %v153
    %197 = vst [vmem:[%s183] ss:$4 sm:$0xff] %v154
    %198 = vst [vmem:[%s185] ss:$4 sm:$0xff] %v155
    %199 = vst [vmem:[%s187] ss:$4 sm:$0xff] %v156
    %200 = vst [vmem:[%s189] ss:$4 sm:$0xff] %v157
    %v201 = vld.sshfl [vmem:[#allocation1] sm:$0xff pattern:$0x73625140]
    %v202 = vld.sshfl [vmem:[#allocation1 + $0x20] sm:$0xff pattern:$0x73625140]
    %v207 = vpack.c.bf16 %v192, %v191
    %v208 = vpack.c.bf16 %v202, %v201
    %v209 = vld [vmem:[#allocation6] sm:$0xf]
    %v210 = vld [vmem:[#allocation6 + $0x4] sm:$0xf]
    %v211 = vld [vmem:[#allocation6 + $0x8] sm:$0xf]
    %v212 = vld [vmem:[#allocation6 + $0xc] sm:$0xf]
    %v213 = vld [vmem:[#allocation6 + $0x10] sm:$0xf]
    %v214 = vld [vmem:[#allocation6 + $0x14] sm:$0xf]
    %v215 = vld [vmem:[#allocation6 + $0x18] sm:$0xf]
    %v216 = vld [vmem:[#allocation6 + $0x1c] sm:$0xf]
    %v217 = vld [vmem:[#allocation6 + $0x20] sm:$0xf]
    %v218 = vld [vmem:[#allocation6 + $0x24] sm:$0xf]
    %v219 = vld [vmem:[#allocation6 + $0x28] sm:$0xf]
    %v220 = vld [vmem:[#allocation6 + $0x2c] sm:$0xf]
    %v221 = vld [vmem:[#allocation6 + $0x30] sm:$0xf]
    %v222 = vld [vmem:[#allocation6 + $0x34] sm:$0xf]
    %v223 = vld [vmem:[#allocation6 + $0x38] sm:$0xf]
    %v224 = vld [vmem:[#allocation6 + $0x3c] sm:$0xf]
    %226 = vst [vmem:[#allocation1] ss:$4 sm:$0xff] %v143
    %s227 = scalar_lea.vmem [#allocation1], 1
    %228 = vst [vmem:[%s227] ss:$4 sm:$0xff] %v144
    %s229 = scalar_lea.vmem [#allocation1], 2
    %230 = vst [vmem:[%s229] ss:$4 sm:$0xff] %v145
    %s231 = scalar_lea.vmem [#allocation1], 3
    %232 = vst [vmem:[%s231] ss:$4 sm:$0xff] %v146
    %s233 = scalar_lea.vmem [#allocation1], 32
    %234 = vst [vmem:[%s233] ss:$4 sm:$0xff] %v147
    %s235 = scalar_lea.vmem [#allocation1], 33
    %236 = vst [vmem:[%s235] ss:$4 sm:$0xff] %v148
    %s237 = scalar_lea.vmem [#allocation1], 34
    %238 = vst [vmem:[%s237] ss:$4 sm:$0xff] %v149
    %s239 = scalar_lea.vmem [#allocation1], 35
    %240 = vst [vmem:[%s239] ss:$4 sm:$0xff] %v150
    %v241 = vld.sshfl [vmem:[#allocation1] sm:$0xff pattern:$0x73625140]
    %v242 = vld.sshfl [vmem:[#allocation1 + $0x20] sm:$0xff pattern:$0x73625140]
    %243 = vst [vmem:[#allocation1] ss:$4 sm:$0xff] %v151
    %244 = vst [vmem:[%s227] ss:$4 sm:$0xff] %v152
    %245 = vst [vmem:[%s229] ss:$4 sm:$0xff] %v153
    %246 = vst [vmem:[%s231] ss:$4 sm:$0xff] %v154
    %247 = vst [vmem:[%s233] ss:$4 sm:$0xff] %v155
    %248 = vst [vmem:[%s235] ss:$4 sm:$0xff] %v156
    %249 = vst [vmem:[%s237] ss:$4 sm:$0xff] %v157
    %250 = vst [vmem:[%s239] ss:$4 sm:$0xff] %v158
    %v251 = vld.sshfl [vmem:[#allocation1] sm:$0xff pattern:$0x73625140]
    %v252 = vld.sshfl [vmem:[#allocation1 + $0x20] sm:$0xff pattern:$0x73625140]
    %v257 = vpack.c.bf16 %v242, %v241
    %v258 = vpack.c.bf16 %v252, %v251
    %s259 = scalar_lea.vmem [#allocation6], 64
    %v260 = vld [vmem:[%s259] sm:$0xf]
    %v261 = vld [vmem:[%s259 + $0x4] sm:$0xf]
    %v262 = vld [vmem:[%s259 + $0x8] sm:$0xf]
    %v263 = vld [vmem:[%s259 + $0xc] sm:$0xf]
    %v264 = vld [vmem:[%s259 + $0x10] sm:$0xf]
    %v265 = vld [vmem:[%s259 + $0x14] sm:$0xf]
    %v266 = vld [vmem:[%s259 + $0x18] sm:$0xf]
    %v267 = vld [vmem:[%s259 + $0x1c] sm:$0xf]
    %v268 = vld [vmem:[%s259 + $0x20] sm:$0xf]
    %v269 = vld [vmem:[%s259 + $0x24] sm:$0xf]
    %v270 = vld [vmem:[%s259 + $0x28] sm:$0xf]
    %v271 = vld [vmem:[%s259 + $0x2c] sm:$0xf]
    %v272 = vld [vmem:[%s259 + $0x30] sm:$0xf]
    %v273 = vld [vmem:[%s259 + $0x34] sm:$0xf]
    %v274 = vld [vmem:[%s259 + $0x38] sm:$0xf]
    %v275 = vld [vmem:[%s259 + $0x3c] sm:$0xf]
    %v292 = vunpack.c.l.b16 %v260
    %v293 = vunpack.c.l.b16 %v261
    %v294 = vunpack.c.l.b16 %v262
    %v295 = vunpack.c.l.b16 %v263
    %v296 = vunpack.c.l.b16 %v264
    %v297 = vunpack.c.l.b16 %v265
    %v298 = vunpack.c.l.b16 %v266
    %v299 = vunpack.c.l.b16 %v267
    %v300 = vunpack.c.l.b16 %v268
    %v301 = vunpack.c.l.b16 %v269
    %v302 = vunpack.c.l.b16 %v270
    %v303 = vunpack.c.l.b16 %v271
    %v304 = vunpack.c.l.b16 %v272
    %v305 = vunpack.c.l.b16 %v273
    %v306 = vunpack.c.l.b16 %v274
    %v307 = vunpack.c.l.b16 %v275
    %v308 = vpack.c.b16 %v293, %v292
    %v309 = vpack.c.b16 %v295, %v294
    %v310 = vpack.c.b16 %v297, %v296
    %v311 = vpack.c.b16 %v299, %v298
    %v312 = vpack.c.b16 %v301, %v300
    %v313 = vpack.c.b16 %v303, %v302
    %v314 = vpack.c.b16 %v305, %v304
    %v315 = vpack.c.b16 %v307, %v306
    %324 = vmatpush.bf16.msra.mxu0 %v315
    %325 = vmatpush.bf16.msra.mxu0 %v314
    %326 = vmatpush.bf16.msra.mxu0 %v313
    %327 = vmatpush.bf16.msra.mxu0 %v312
    %328 = vmatpush.bf16.msra.mxu0 %v311
    %329 = vmatpush.bf16.msra.mxu0 %v310
    %330 = vmatpush.bf16.msra.mxu0 %v309
    %331 = vmatpush.bf16.msra.mxu0 %v308
    %332 = vmatmul.bf16.gmra.mxu0 %v257
    %v333 = vpop.f32.mrf.mxu0
    %v334 = vadd.f32 0.0, %v333
    %v335 = vpop.f32.mrf.mxu0
    %v336 = vadd.f32 0.0, %v335
    %337 = vmatmul.bf16.gmra.mxu0 %v258
    %v338 = vpop.f32.mrf.mxu0
    %v339 = vadd.f32 0.0, %v338
    %v340 = vpop.f32.mrf.mxu0
    %v341 = vadd.f32 0.0, %v340
    %342 = vdwg.mxu0
    %v359 = vunpack.c.l.b16 %v209
    %v360 = vunpack.c.l.b16 %v210
    %v361 = vunpack.c.l.b16 %v211
    %v362 = vunpack.c.l.b16 %v212
    %v363 = vunpack.c.l.b16 %v213
    %v364 = vunpack.c.l.b16 %v214
    %v365 = vunpack.c.l.b16 %v215
    %v366 = vunpack.c.l.b16 %v216
    %v367 = vunpack.c.l.b16 %v217
    %v368 = vunpack.c.l.b16 %v218
    %v369 = vunpack.c.l.b16 %v219
    %v370 = vunpack.c.l.b16 %v220
    %v371 = vunpack.c.l.b16 %v221
    %v372 = vunpack.c.l.b16 %v222
    %v373 = vunpack.c.l.b16 %v223
    %v374 = vunpack.c.l.b16 %v224
    %v375 = vpack.c.b16 %v360, %v359
    %v376 = vpack.c.b16 %v362, %v361
    %v377 = vpack.c.b16 %v364, %v363
    %v378 = vpack.c.b16 %v366, %v365
    %v379 = vpack.c.b16 %v368, %v367
    %v380 = vpack.c.b16 %v370, %v369
    %v381 = vpack.c.b16 %v372, %v371
    %v382 = vpack.c.b16 %v374, %v373
    %391 = vmatpush.bf16.msra.mxu0 %v382
    %392 = vmatpush.bf16.msra.mxu0 %v381
    %393 = vmatpush.bf16.msra.mxu0 %v380
    %394 = vmatpush.bf16.msra.mxu0 %v379
    %395 = vmatpush.bf16.msra.mxu0 %v378
    %396 = vmatpush.bf16.msra.mxu0 %v377
    %397 = vmatpush.bf16.msra.mxu0 %v376
    %398 = vmatpush.bf16.msra.mxu0 %v375
    %399 = vmatmul.bf16.gmra.mxu0 %v207
    %v400 = vpop.f32.mrf.mxu0
    %v401 = vadd.f32 %v334, %v400
    %v402 = vpop.f32.mrf.mxu0
    %v403 = vadd.f32 %v336, %v402
    %404 = vmatmul.bf16.gmra.mxu0 %v208
    %v405 = vpop.f32.mrf.mxu0
    %v406 = vadd.f32 %v339, %v405
    %v407 = vpop.f32.mrf.mxu0
    %v408 = vadd.f32 %v341, %v407
    %409 = vdwg.mxu0
    %411 = vst [vmem:[#allocation1] ss:$4 sm:$0xff] %v144
    %s412 = scalar_lea.vmem [#allocation1], 1
    %413 = vst [vmem:[%s412] ss:$4 sm:$0xff] %v145
    %s414 = scalar_lea.vmem [#allocation1], 2
    %415 = vst [vmem:[%s414] ss:$4 sm:$0xff] %v146
    %s416 = scalar_lea.vmem [#allocation1], 3
    %417 = vst [vmem:[%s416] ss:$4 sm:$0xff] %v147
    %s418 = scalar_lea.vmem [#allocation1], 32
    %419 = vst [vmem:[%s418] ss:$4 sm:$0xff] %v148
    %s420 = scalar_lea.vmem [#allocation1], 33
    %421 = vst [vmem:[%s420] ss:$4 sm:$0xff] %v149
    %s422 = scalar_lea.vmem [#allocation1], 34
    %423 = vst [vmem:[%s422] ss:$4 sm:$0xff] %v150
    %s424 = scalar_lea.vmem [#allocation1], 35
    %425 = vst [vmem:[%s424] ss:$4 sm:$0xff] %v151
    %v426 = vld.sshfl [vmem:[#allocation1] sm:$0xff pattern:$0x73625140]
    %v427 = vld.sshfl [vmem:[#allocation1 + $0x20] sm:$0xff pattern:$0x73625140]
    %428 = vst [vmem:[#allocation1] ss:$4 sm:$0xff] %v152
    %429 = vst [vmem:[%s412] ss:$4 sm:$0xff] %v153
    %430 = vst [vmem:[%s414] ss:$4 sm:$0xff] %v154
    %431 = vst [vmem:[%s416] ss:$4 sm:$0xff] %v155
    %432 = vst [vmem:[%s418] ss:$4 sm:$0xff] %v156
    %433 = vst [vmem:[%s420] ss:$4 sm:$0xff] %v157
    %434 = vst [vmem:[%s422] ss:$4 sm:$0xff] %v158
    %435 = vst [vmem:[%s424] ss:$4 sm:$0xff] %v159
    %v436 = vld.sshfl [vmem:[#allocation1] sm:$0xff pattern:$0x73625140]
    %v437 = vld.sshfl [vmem:[#allocation1 + $0x20] sm:$0xff pattern:$0x73625140]
    %v442 = vpack.c.bf16 %v427, %v426
    %v443 = vpack.c.bf16 %v437, %v436
    %s444 = scalar_lea.vmem [#allocation6], 128
    %v445 = vld [vmem:[%s444] sm:$0xf]
    %v446 = vld [vmem:[%s444 + $0x4] sm:$0xf]
    %v447 = vld [vmem:[%s444 + $0x8] sm:$0xf]
    %v448 = vld [vmem:[%s444 + $0xc] sm:$0xf]
    %v449 = vld [vmem:[%s444 + $0x10] sm:$0xf]
    %v450 = vld [vmem:[%s444 + $0x14] sm:$0xf]
    %v451 = vld [vmem:[%s444 + $0x18] sm:$0xf]
    %v452 = vld [vmem:[%s444 + $0x1c] sm:$0xf]
    %v453 = vld [vmem:[%s444 + $0x20] sm:$0xf]
    %v454 = vld [vmem:[%s444 + $0x24] sm:$0xf]
    %v455 = vld [vmem:[%s444 + $0x28] sm:$0xf]
    %v456 = vld [vmem:[%s444 + $0x2c] sm:$0xf]
    %v457 = vld [vmem:[%s444 + $0x30] sm:$0xf]
    %v458 = vld [vmem:[%s444 + $0x34] sm:$0xf]
    %v459 = vld [vmem:[%s444 + $0x38] sm:$0xf]
    %v460 = vld [vmem:[%s444 + $0x3c] sm:$0xf]
    %v477 = vunpack.c.l.b16 %v445
    %v478 = vunpack.c.l.b16 %v446
    %v479 = vunpack.c.l.b16 %v447
    %v480 = vunpack.c.l.b16 %v448
    %v481 = vunpack.c.l.b16 %v449
    %v482 = vunpack.c.l.b16 %v450
    %v483 = vunpack.c.l.b16 %v451
    %v484 = vunpack.c.l.b16 %v452
    %v485 = vunpack.c.l.b16 %v453
    %v486 = vunpack.c.l.b16 %v454
    %v487 = vunpack.c.l.b16 %v455
    %v488 = vunpack.c.l.b16 %v456
    %v489 = vunpack.c.l.b16 %v457
    %v490 = vunpack.c.l.b16 %v458
    %v491 = vunpack.c.l.b16 %v459
    %v492 = vunpack.c.l.b16 %v460
    %v493 = vpack.c.b16 %v478, %v477
    %v494 = vpack.c.b16 %v480, %v479
    %v495 = vpack.c.b16 %v482, %v481
    %v496 = vpack.c.b16 %v484, %v483
    %v497 = vpack.c.b16 %v486, %v485
    %v498 = vpack.c.b16 %v488, %v487
    %v499 = vpack.c.b16 %v490, %v489
    %v500 = vpack.c.b16 %v492, %v491
    %509 = vmatpush.bf16.msra.mxu0 %v500
    %510 = vmatpush.bf16.msra.mxu0 %v499
    %511 = vmatpush.bf16.msra.mxu0 %v498
    %512 = vmatpush.bf16.msra.mxu0 %v497
    %513 = vmatpush.bf16.msra.mxu0 %v496
    %514 = vmatpush.bf16.msra.mxu0 %v495
    %515 = vmatpush.bf16.msra.mxu0 %v494
    %516 = vmatpush.bf16.msra.mxu0 %v493
    %517 = vmatmul.bf16.gmra.mxu0 %v442
    %v518 = vpop.f32.mrf.mxu0
    %v519 = vadd.f32 0.0, %v518
    %v520 = vpop.f32.mrf.mxu0
    %v521 = vadd.f32 0.0, %v520
    %522 = vmatmul.bf16.gmra.mxu0 %v443
    %v523 = vpop.f32.mrf.mxu0
    %v524 = vadd.f32 0.0, %v523
    %v525 = vpop.f32.mrf.mxu0
    %v526 = vadd.f32 0.0, %v525
    %527 = vdwg.mxu0
    %v528 = vadd.f32 %v401, %v519
    %v529 = vadd.f32 %v403, %v521
    %v530 = vadd.f32 %v406, %v524
    %v531 = vadd.f32 %v408, %v526
    %v532 = vld [vmem:[%s2] sm:$0x1]
    %v534 = vperm.slane %v532, 0
    %v536 = vadd.f32 %v528, %v534
    %v537 = vadd.f32 %v529, %v534
    %v538 = vadd.f32 %v530, %v534
    %v539 = vadd.f32 %v531, %v534
    %v540 = vmax.f32 %v536, 0.0
    %v541 = vmax.f32 %v537, 0.0
    %v542 = vmax.f32 %v538, 0.0
    %v543 = vmax.f32 %v539, 0.0
    %v548 = vrot.slane %v540, 2
    %v549 = vrot.slane %v540, 4
    %v550 = vrot.slane %v540, 6
    %v551 = vrot.slane %v541, 2
    %v552 = vrot.slane %v541, 4
    %v553 = vrot.slane %v541, 6
    %v554 = vrot.slane %v542, 2
    %v555 = vrot.slane %v542, 4
    %v556 = vrot.slane %v542, 6
    %v557 = vrot.slane %v543, 2
    %v558 = vrot.slane %v543, 4
    %v559 = vrot.slane %v543, 6
    %572 = vst [vmem:[#allocation2] sm:$0x3] 0.0
    %573 = vst [vmem:[%s123] sm:$0x3] 0.0
    %574 = vst [vmem:[%s125] sm:$0x3] %v540
    %575 = vst [vmem:[%s125 + $0x2] sm:$0x3] %v548
    %576 = vst [vmem:[%s125 + $0x4] sm:$0x3] %v549
    %577 = vst [vmem:[%s125 + $0x6] sm:$0x3] %v550
    %578 = vst [vmem:[%s125 + $0x8] sm:$0x3] %v541
    %579 = vst [vmem:[%s125 + $0xa] sm:$0x3] %v551
    %580 = vst [vmem:[%s125 + $0xc] sm:$0x3] %v552
    %581 = vst [vmem:[%s125 + $0xe] sm:$0x3] %v553
    %582 = vst [vmem:[%s125 + $0x10] sm:$0x3] %v542
    %583 = vst [vmem:[%s125 + $0x12] sm:$0x3] %v554
    %584 = vst [vmem:[%s125 + $0x14] sm:$0x3] %v555
    %585 = vst [vmem:[%s125 + $0x16] sm:$0x3] %v556
    %586 = vst [vmem:[%s125 + $0x18] sm:$0x3] %v543
    %587 = vst [vmem:[%s125 + $0x1a] sm:$0x3] %v557
    %588 = vst [vmem:[%s125 + $0x1c] sm:$0x3] %v558
    %589 = vst [vmem:[%s125 + $0x1e] sm:$0x3] %v559
    %v590 = vld [vmem:[#allocation2] sm:$0x3]
    %v591 = vld [vmem:[#allocation2 + $0x2] sm:$0x3]
    %v592 = vld [vmem:[#allocation2 + $0x4] sm:$0x3]
    %v593 = vld [vmem:[#allocation2 + $0x6] sm:$0x3]
    %v594 = vld [vmem:[#allocation2 + $0x8] sm:$0x3]
    %v595 = vld [vmem:[#allocation2 + $0xa] sm:$0x3]
    %v596 = vld [vmem:[#allocation2 + $0xc] sm:$0x3]
    %v597 = vld [vmem:[#allocation2 + $0xe] sm:$0x3]
    %v598 = vld [vmem:[#allocation2 + $0x10] sm:$0x3]
    %v599 = vld [vmem:[#allocation2 + $0x12] sm:$0x3]
    %v600 = vld [vmem:[#allocation2 + $0x14] sm:$0x3]
    %v601 = vld [vmem:[#allocation2 + $0x16] sm:$0x3]
    %v602 = vld [vmem:[#allocation2 + $0x18] sm:$0x3]
    %v603 = vld [vmem:[#allocation2 + $0x1a] sm:$0x3]
    %v604 = vld [vmem:[#allocation2 + $0x1c] sm:$0x3]
    %v605 = vld [vmem:[#allocation2 + $0x1e] sm:$0x3]
    %v606 = vld [vmem:[#allocation2 + $0x20] sm:$0x3]
    %v607 = vld [vmem:[#allocation2 + $0x22] sm:$0x3]
    %624 = vst [vmem:[#allocation1] ss:$4 sm:$0xff] %v590
    %s625 = scalar_lea.vmem [#allocation1], 1
    %626 = vst [vmem:[%s625] ss:$4 sm:$0xff] %v591
    %s627 = scalar_lea.vmem [#allocation1], 2
    %628 = vst [vmem:[%s627] ss:$4 sm:$0xff] %v592
    %s629 = scalar_lea.vmem [#allocation1], 3
    %630 = vst [vmem:[%s629] ss:$4 sm:$0xff] %v593
    %s631 = scalar_lea.vmem [#allocation1], 32
    %632 = vst [vmem:[%s631] ss:$4 sm:$0xff] %v594
    %s633 = scalar_lea.vmem [#allocation1], 33
    %634 = vst [vmem:[%s633] ss:$4 sm:$0xff] %v595
    %s635 = scalar_lea.vmem [#allocation1], 34
    %636 = vst [vmem:[%s635] ss:$4 sm:$0xff] %v596
    %s637 = scalar_lea.vmem [#allocation1], 35
    %638 = vst [vmem:[%s637] ss:$4 sm:$0xff] %v597
    %v639 = vld.sshfl [vmem:[#allocation1] sm:$0xff pattern:$0x73625140]
    %v640 = vld.sshfl [vmem:[#allocation1 + $0x20] sm:$0xff pattern:$0x73625140]
    %641 = vst [vmem:[#allocation1] ss:$4 sm:$0xff] %v598
    %642 = vst [vmem:[%s625] ss:$4 sm:$0xff] %v599
    %643 = vst [vmem:[%s627] ss:$4 sm:$0xff] %v600
    %644 = vst [vmem:[%s629] ss:$4 sm:$0xff] %v601
    %645 = vst [vmem:[%s631] ss:$4 sm:$0xff] %v602
    %646 = vst [vmem:[%s633] ss:$4 sm:$0xff] %v603
    %647 = vst [vmem:[%s635] ss:$4 sm:$0xff] %v604
    %648 = vst [vmem:[%s637] ss:$4 sm:$0xff] %v605
    %v649 = vld.sshfl [vmem:[#allocation1] sm:$0xff pattern:$0x73625140]
    %v650 = vld.sshfl [vmem:[#allocation1 + $0x20] sm:$0xff pattern:$0x73625140]
    %v655 = vpack.c.bf16 %v640, %v639
    %v656 = vpack.c.bf16 %v650, %v649
    %v657 = vld [vmem:[#allocation8] sm:$0xf]
    %v658 = vld [vmem:[#allocation8 + $0x4] sm:$0xf]
    %v659 = vld [vmem:[#allocation8 + $0x8] sm:$0xf]
    %v660 = vld [vmem:[#allocation8 + $0xc] sm:$0xf]
    %v661 = vld [vmem:[#allocation8 + $0x10] sm:$0xf]
    %v662 = vld [vmem:[#allocation8 + $0x14] sm:$0xf]
    %v663 = vld [vmem:[#allocation8 + $0x18] sm:$0xf]
    %v664 = vld [vmem:[#allocation8 + $0x1c] sm:$0xf]
    %v665 = vld [vmem:[#allocation8 + $0x20] sm:$0xf]
    %v666 = vld [vmem:[#allocation8 + $0x24] sm:$0xf]
    %v667 = vld [vmem:[#allocation8 + $0x28] sm:$0xf]
    %v668 = vld [vmem:[#allocation8 + $0x2c] sm:$0xf]
    %v669 = vld [vmem:[#allocation8 + $0x30] sm:$0xf]
    %v670 = vld [vmem:[#allocation8 + $0x34] sm:$0xf]
    %v671 = vld [vmem:[#allocation8 + $0x38] sm:$0xf]
    %v672 = vld [vmem:[#allocation8 + $0x3c] sm:$0xf]
    %674 = vst [vmem:[#allocation1] ss:$4 sm:$0xff] %v591
    %s675 = scalar_lea.vmem [#allocation1], 1
    %676 = vst [vmem:[%s675] ss:$4 sm:$0xff] %v592
    %s677 = scalar_lea.vmem [#allocation1], 2
    %678 = vst [vmem:[%s677] ss:$4 sm:$0xff] %v593
    %s679 = scalar_lea.vmem [#allocation1], 3
    %680 = vst [vmem:[%s679] ss:$4 sm:$0xff] %v594
    %s681 = scalar_lea.vmem [#allocation1], 32
    %682 = vst [vmem:[%s681] ss:$4 sm:$0xff] %v595
    %s683 = scalar_lea.vmem [#allocation1], 33
    %684 = vst [vmem:[%s683] ss:$4 sm:$0xff] %v596
    %s685 = scalar_lea.vmem [#allocation1], 34
    %686 = vst [vmem:[%s685] ss:$4 sm:$0xff] %v597
    %s687 = scalar_lea.vmem [#allocation1], 35
    %688 = vst [vmem:[%s687] ss:$4 sm:$0xff] %v598
    %v689 = vld.sshfl [vmem:[#allocation1] sm:$0xff pattern:$0x73625140]
    %v690 = vld.sshfl [vmem:[#allocation1 + $0x20] sm:$0xff pattern:$0x73625140]
    %691 = vst [vmem:[#allocation1] ss:$4 sm:$0xff] %v599
    %692 = vst [vmem:[%s675] ss:$4 sm:$0xff] %v600
    %693 = vst [vmem:[%s677] ss:$4 sm:$0xff] %v601
    %694 = vst [vmem:[%s679] ss:$4 sm:$0xff] %v602
    %695 = vst [vmem:[%s681] ss:$4 sm:$0xff] %v603
    %696 = vst [vmem:[%s683] ss:$4 sm:$0xff] %v604
    %697 = vst [vmem:[%s685] ss:$4 sm:$0xff] %v605
    %698 = vst [vmem:[%s687] ss:$4 sm:$0xff] %v606
    %v699 = vld.sshfl [vmem:[#allocation1] sm:$0xff pattern:$0x73625140]
    %v700 = vld.sshfl [vmem:[#allocation1 + $0x20] sm:$0xff pattern:$0x73625140]
    %v705 = vpack.c.bf16 %v690, %v689
    %v706 = vpack.c.bf16 %v700, %v699
    %s707 = scalar_lea.vmem [#allocation8], 64
    %v708 = vld [vmem:[%s707] sm:$0xf]
    %v709 = vld [vmem:[%s707 + $0x4] sm:$0xf]
    %v710 = vld [vmem:[%s707 + $0x8] sm:$0xf]
    %v711 = vld [vmem:[%s707 + $0xc] sm:$0xf]
    %v712 = vld [vmem:[%s707 + $0x10] sm:$0xf]
    %v713 = vld [vmem:[%s707 + $0x14] sm:$0xf]
    %v714 = vld [vmem:[%s707 + $0x18] sm:$0xf]
    %v715 = vld [vmem:[%s707 + $0x1c] sm:$0xf]
    %v716 = vld [vmem:[%s707 + $0x20] sm:$0xf]
    %v717 = vld [vmem:[%s707 + $0x24] sm:$0xf]
    %v718 = vld [vmem:[%s707 + $0x28] sm:$0xf]
    %v719 = vld [vmem:[%s707 + $0x2c] sm:$0xf]
    %v720 = vld [vmem:[%s707 + $0x30] sm:$0xf]
    %v721 = vld [vmem:[%s707 + $0x34] sm:$0xf]
    %v722 = vld [vmem:[%s707 + $0x38] sm:$0xf]
    %v723 = vld [vmem:[%s707 + $0x3c] sm:$0xf]
    %v740 = vunpack.c.l.b16 %v708
    %v741 = vunpack.c.l.b16 %v709
    %v742 = vunpack.c.l.b16 %v710
    %v743 = vunpack.c.l.b16 %v711
    %v744 = vunpack.c.l.b16 %v712
    %v745 = vunpack.c.l.b16 %v713
    %v746 = vunpack.c.l.b16 %v714
    %v747 = vunpack.c.l.b16 %v715
    %v748 = vunpack.c.l.b16 %v716
    %v749 = vunpack.c.l.b16 %v717
    %v750 = vunpack.c.l.b16 %v718
    %v751 = vunpack.c.l.b16 %v719
    %v752 = vunpack.c.l.b16 %v720
    %v753 = vunpack.c.l.b16 %v721
    %v754 = vunpack.c.l.b16 %v722
    %v755 = vunpack.c.l.b16 %v723
    %v756 = vpack.c.b16 %v741, %v740
    %v757 = vpack.c.b16 %v743, %v742
    %v758 = vpack.c.b16 %v745, %v744
    %v759 = vpack.c.b16 %v747, %v746
    %v760 = vpack.c.b16 %v749, %v748
    %v761 = vpack.c.b16 %v751, %v750
    %v762 = vpack.c.b16 %v753, %v752
    %v763 = vpack.c.b16 %v755, %v754
    %772 = vmatpush.bf16.msra.mxu0 %v763
    %773 = vmatpush.bf16.msra.mxu0 %v762
    %774 = vmatpush.bf16.msra.mxu0 %v761
    %775 = vmatpush.bf16.msra.mxu0 %v760
    %776 = vmatpush.bf16.msra.mxu0 %v759
    %777 = vmatpush.bf16.msra.mxu0 %v758
    %778 = vmatpush.bf16.msra.mxu0 %v757
    %779 = vmatpush.bf16.msra.mxu0 %v756
    %780 = vmatmul.bf16.gmra.mxu0 %v705
    %v781 = vpop.f32.mrf.mxu0
    %v782 = vadd.f32 0.0, %v781
    %v783 = vpop.f32.mrf.mxu0
    %v784 = vadd.f32 0.0, %v783
    %785 = vmatmul.bf16.gmra.mxu0 %v706
    %v786 = vpop.f32.mrf.mxu0
    %v787 = vadd.f32 0.0, %v786
    %v788 = vpop.f32.mrf.mxu0
    %v789 = vadd.f32 0.0, %v788
    %790 = vdwg.mxu0
    %v807 = vunpack.c.l.b16 %v657
    %v808 = vunpack.c.l.b16 %v658
    %v809 = vunpack.c.l.b16 %v659
    %v810 = vunpack.c.l.b16 %v660
    %v811 = vunpack.c.l.b16 %v661
    %v812 = vunpack.c.l.b16 %v662
    %v813 = vunpack.c.l.b16 %v663
    %v814 = vunpack.c.l.b16 %v664
    %v815 = vunpack.c.l.b16 %v665
    %v816 = vunpack.c.l.b16 %v666
    %v817 = vunpack.c.l.b16 %v667
    %v818 = vunpack.c.l.b16 %v668
    %v819 = vunpack.c.l.b16 %v669
    %v820 = vunpack.c.l.b16 %v670
    %v821 = vunpack.c.l.b16 %v671
    %v822 = vunpack.c.l.b16 %v672
    %v823 = vpack.c.b16 %v808, %v807
    %v824 = vpack.c.b16 %v810, %v809
    %v825 = vpack.c.b16 %v812, %v811
    %v826 = vpack.c.b16 %v814, %v813
    %v827 = vpack.c.b16 %v816, %v815
    %v828 = vpack.c.b16 %v818, %v817
    %v829 = vpack.c.b16 %v820, %v819
    %v830 = vpack.c.b16 %v822, %v821
    %839 = vmatpush.bf16.msra.mxu0 %v830
    %840 = vmatpush.bf16.msra.mxu0 %v829
    %841 = vmatpush.bf16.msra.mxu0 %v828
    %842 = vmatpush.bf16.msra.mxu0 %v827
    %843 = vmatpush.bf16.msra.mxu0 %v826
    %844 = vmatpush.bf16.msra.mxu0 %v825
    %845 = vmatpush.bf16.msra.mxu0 %v824
    %846 = vmatpush.bf16.msra.mxu0 %v823
    %847 = vmatmul.bf16.gmra.mxu0 %v655
    %v848 = vpop.f32.mrf.mxu0
    %v849 = vadd.f32 %v782, %v848
    %v850 = vpop.f32.mrf.mxu0
    %v851 = vadd.f32 %v784, %v850
    %852 = vmatmul.bf16.gmra.mxu0 %v656
    %v853 = vpop.f32.mrf.mxu0
    %v854 = vadd.f32 %v787, %v853
    %v855 = vpop.f32.mrf.mxu0
    %v856 = vadd.f32 %v789, %v855
    %857 = vdwg.mxu0
    %859 = vst [vmem:[#allocation1] ss:$4 sm:$0xff] %v592
    %s860 = scalar_lea.vmem [#allocation1], 1
    %861 = vst [vmem:[%s860] ss:$4 sm:$0xff] %v593
    %s862 = scalar_lea.vmem [#allocation1], 2
    %863 = vst [vmem:[%s862] ss:$4 sm:$0xff] %v594
    %s864 = scalar_lea.vmem [#allocation1], 3
    %865 = vst [vmem:[%s864] ss:$4 sm:$0xff] %v595
    %s866 = scalar_lea.vmem [#allocation1], 32
    %867 = vst [vmem:[%s866] ss:$4 sm:$0xff] %v596
    %s868 = scalar_lea.vmem [#allocation1], 33
    %869 = vst [vmem:[%s868] ss:$4 sm:$0xff] %v597
    %s870 = scalar_lea.vmem [#allocation1], 34
    %871 = vst [vmem:[%s870] ss:$4 sm:$0xff] %v598
    %s872 = scalar_lea.vmem [#allocation1], 35
    %873 = vst [vmem:[%s872] ss:$4 sm:$0xff] %v599
    %v874 = vld.sshfl [vmem:[#allocation1] sm:$0xff pattern:$0x73625140]
    %v875 = vld.sshfl [vmem:[#allocation1 + $0x20] sm:$0xff pattern:$0x73625140]
    %876 = vst [vmem:[#allocation1] ss:$4 sm:$0xff] %v600
    %877 = vst [vmem:[%s860] ss:$4 sm:$0xff] %v601
    %878 = vst [vmem:[%s862] ss:$4 sm:$0xff] %v602
    %879 = vst [vmem:[%s864] ss:$4 sm:$0xff] %v603
    %880 = vst [vmem:[%s866] ss:$4 sm:$0xff] %v604
    %881 = vst [vmem:[%s868] ss:$4 sm:$0xff] %v605
    %882 = vst [vmem:[%s870] ss:$4 sm:$0xff] %v606
    %883 = vst [vmem:[%s872] ss:$4 sm:$0xff] %v607
    %v884 = vld.sshfl [vmem:[#allocation1] sm:$0xff pattern:$0x73625140]
    %v885 = vld.sshfl [vmem:[#allocation1 + $0x20] sm:$0xff pattern:$0x73625140]
    %v890 = vpack.c.bf16 %v875, %v874
    %v891 = vpack.c.bf16 %v885, %v884
    %s892 = scalar_lea.vmem [#allocation8], 128
    %v893 = vld [vmem:[%s892] sm:$0xf]
    %v894 = vld [vmem:[%s892 + $0x4] sm:$0xf]
    %v895 = vld [vmem:[%s892 + $0x8] sm:$0xf]
    %v896 = vld [vmem:[%s892 + $0xc] sm:$0xf]
    %v897 = vld [vmem:[%s892 + $0x10] sm:$0xf]
    %v898 = vld [vmem:[%s892 + $0x14] sm:$0xf]
    %v899 = vld [vmem:[%s892 + $0x18] sm:$0xf]
    %v900 = vld [vmem:[%s892 + $0x1c] sm:$0xf]
    %v901 = vld [vmem:[%s892 + $0x20] sm:$0xf]
    %v902 = vld [vmem:[%s892 + $0x24] sm:$0xf]
    %v903 = vld [vmem:[%s892 + $0x28] sm:$0xf]
    %v904 = vld [vmem:[%s892 + $0x2c] sm:$0xf]
    %v905 = vld [vmem:[%s892 + $0x30] sm:$0xf]
    %v906 = vld [vmem:[%s892 + $0x34] sm:$0xf]
    %v907 = vld [vmem:[%s892 + $0x38] sm:$0xf]
    %v908 = vld [vmem:[%s892 + $0x3c] sm:$0xf]
    %v925 = vunpack.c.l.b16 %v893
    %v926 = vunpack.c.l.b16 %v894
    %v927 = vunpack.c.l.b16 %v895
    %v928 = vunpack.c.l.b16 %v896
    %v929 = vunpack.c.l.b16 %v897
    %v930 = vunpack.c.l.b16 %v898
    %v931 = vunpack.c.l.b16 %v899
    %v932 = vunpack.c.l.b16 %v900
    %v933 = vunpack.c.l.b16 %v901
    %v934 = vunpack.c.l.b16 %v902
    %v935 = vunpack.c.l.b16 %v903
    %v936 = vunpack.c.l.b16 %v904
    %v937 = vunpack.c.l.b16 %v905
    %v938 = vunpack.c.l.b16 %v906
    %v939 = vunpack.c.l.b16 %v907
    %v940 = vunpack.c.l.b16 %v908
    %v941 = vpack.c.b16 %v926, %v925
    %v942 = vpack.c.b16 %v928, %v927
    %v943 = vpack.c.b16 %v930, %v929
    %v944 = vpack.c.b16 %v932, %v931
    %v945 = vpack.c.b16 %v934, %v933
    %v946 = vpack.c.b16 %v936, %v935
    %v947 = vpack.c.b16 %v938, %v937
    %v948 = vpack.c.b16 %v940, %v939
    %957 = vmatpush.bf16.msra.mxu0 %v948
    %958 = vmatpush.bf16.msra.mxu0 %v947
    %959 = vmatpush.bf16.msra.mxu0 %v946
    %960 = vmatpush.bf16.msra.mxu0 %v945
    %961 = vmatpush.bf16.msra.mxu0 %v944
    %962 = vmatpush.bf16.msra.mxu0 %v943
    %963 = vmatpush.bf16.msra.mxu0 %v942
    %964 = vmatpush.bf16.msra.mxu0 %v941
    %965 = vmatmul.bf16.gmra.mxu0 %v890
    %v966 = vpop.f32.mrf.mxu0
    %v967 = vadd.f32 0.0, %v966
    %v968 = vpop.f32.mrf.mxu0
    %v969 = vadd.f32 0.0, %v968
    %970 = vmatmul.bf16.gmra.mxu0 %v891
    %v971 = vpop.f32.mrf.mxu0
    %v972 = vadd.f32 0.0, %v971
    %v973 = vpop.f32.mrf.mxu0
    %v974 = vadd.f32 0.0, %v973
    %975 = vdwg.mxu0
    %v976 = vadd.f32 %v849, %v967
    %v977 = vadd.f32 %v851, %v969
    %v978 = vadd.f32 %v854, %v972
    %v979 = vadd.f32 %v856, %v974
    %v980 = vld [vmem:[%s4] sm:$0x1]
    %v982 = vperm.slane %v980, 0
    %v984 = vadd.f32 %v976, %v982
    %v985 = vadd.f32 %v977, %v982
    %v986 = vadd.f32 %v978, %v982
    %v987 = vadd.f32 %v979, %v982
    %v988 = vmax.f32 %v984, 0.0
    %v989 = vmax.f32 %v985, 0.0
    %v990 = vmax.f32 %v986, 0.0
    %v991 = vmax.f32 %v987, 0.0
    %v992 = vpack.c.bf16 %v989, %v988
    %v993 = vpack.c.bf16 %v991, %v990
    %v994 = vld [vmem:[#allocation9] sm:$0xff]
    %v995 = vld [vmem:[#allocation9 + $0x8] sm:$0xff]
    %v996 = vld [vmem:[#allocation9 + $0x10] sm:$0xff]
    %v997 = vld [vmem:[#allocation9 + $0x18] sm:$0xff]
    %v998 = vld [vmem:[#allocation9 + $0x20] sm:$0xff]
    %v999 = vld [vmem:[#allocation9 + $0x28] sm:$0xff]
    %v1000 = vld [vmem:[#allocation9 + $0x30] sm:$0xff]
    %v1001 = vld [vmem:[#allocation9 + $0x38] sm:$0xff]
    %v1002 = vld [vmem:[#allocation9 + $0x40] sm:$0xff]
    %v1003 = vld [vmem:[#allocation9 + $0x48] sm:$0xff]
    %v1004 = vld [vmem:[#allocation9 + $0x50] sm:$0xff]
    %v1005 = vld [vmem:[#allocation9 + $0x58] sm:$0xff]
    %v1006 = vld [vmem:[#allocation9 + $0x60] sm:$0xff]
    %v1007 = vld [vmem:[#allocation9 + $0x68] sm:$0xff]
    %v1008 = vld [vmem:[#allocation9 + $0x70] sm:$0xff]
    %v1009 = vld [vmem:[#allocation9 + $0x78] sm:$0xff]
    %v1010 = vld [vmem:[#allocation9 + $0x80] sm:$0xff]
    %v1011 = vld [vmem:[#allocation9 + $0x88] sm:$0xff]
    %v1012 = vld [vmem:[#allocation9 + $0x90] sm:$0xff]
    %v1013 = vld [vmem:[#allocation9 + $0x98] sm:$0xff]
    %v1014 = vld [vmem:[#allocation9 + $0xa0] sm:$0xff]
    %v1015 = vld [vmem:[#allocation9 + $0xa8] sm:$0xff]
    %v1016 = vld [vmem:[#allocation9 + $0xb0] sm:$0xff]
    %v1017 = vld [vmem:[#allocation9 + $0xb8] sm:$0xff]
    %v1018 = vld [vmem:[#allocation9 + $0xc0] sm:$0xff]
    %v1019 = vld [vmem:[#allocation9 + $0xc8] sm:$0xff]
    %v1020 = vld [vmem:[#allocation9 + $0xd0] sm:$0xff]
    %v1021 = vld [vmem:[#allocation9 + $0xd8] sm:$0xff]
    %v1022 = vld [vmem:[#allocation9 + $0xe0] sm:$0xff]
    %v1023 = vld [vmem:[#allocation9 + $0xe8] sm:$0xff]
    %v1024 = vld [vmem:[#allocation9 + $0xf0] sm:$0xff]
    %v1025 = vld [vmem:[#allocation9 + $0xf8] sm:$0xff]
    %v1026 = vld [vmem:[#allocation9 + $0x100] sm:$0xff]
    %v1027 = vld [vmem:[#allocation9 + $0x108] sm:$0xff]
    %v1028 = vld [vmem:[#allocation9 + $0x110] sm:$0xff]
    %v1029 = vld [vmem:[#allocation9 + $0x118] sm:$0xff]
    %v1030 = vld [vmem:[#allocation9 + $0x120] sm:$0xff]
    %v1031 = vld [vmem:[#allocation9 + $0x128] sm:$0xff]
    %v1032 = vld [vmem:[#allocation9 + $0x130] sm:$0xff]
    %v1033 = vld [vmem:[#allocation9 + $0x138] sm:$0xff]
    %v1034 = vld [vmem:[#allocation9 + $0x140] sm:$0xff]
    %v1035 = vld [vmem:[#allocation9 + $0x148] sm:$0xff]
    %v1036 = vld [vmem:[#allocation9 + $0x150] sm:$0xff]
    %v1037 = vld [vmem:[#allocation9 + $0x158] sm:$0xff]
    %v1038 = vld [vmem:[#allocation9 + $0x160] sm:$0xff]
    %v1039 = vld [vmem:[#allocation9 + $0x168] sm:$0xff]
    %v1040 = vld [vmem:[#allocation9 + $0x170] sm:$0xff]
    %v1041 = vld [vmem:[#allocation9 + $0x178] sm:$0xff]
    %v1042 = vld [vmem:[#allocation9 + $0x180] sm:$0xff]
    %v1043 = vld [vmem:[#allocation9 + $0x188] sm:$0xff]
    %v1044 = vld [vmem:[#allocation9 + $0x190] sm:$0xff]
    %v1045 = vld [vmem:[#allocation9 + $0x198] sm:$0xff]
    %v1046 = vld [vmem:[#allocation9 + $0x1a0] sm:$0xff]
    %v1047 = vld [vmem:[#allocation9 + $0x1a8] sm:$0xff]
    %v1048 = vld [vmem:[#allocation9 + $0x1b0] sm:$0xff]
    %v1049 = vld [vmem:[#allocation9 + $0x1b8] sm:$0xff]
    %v1050 = vld [vmem:[#allocation9 + $0x1c0] sm:$0xff]
    %v1051 = vld [vmem:[#allocation9 + $0x1c8] sm:$0xff]
    %v1052 = vld [vmem:[#allocation9 + $0x1d0] sm:$0xff]
    %v1053 = vld [vmem:[#allocation9 + $0x1d8] sm:$0xff]
    %v1054 = vld [vmem:[#allocation9 + $0x1e0] sm:$0xff]
    %v1055 = vld [vmem:[#allocation9 + $0x1e8] sm:$0xff]
    %v1056 = vld [vmem:[#allocation9 + $0x1f0] sm:$0xff]
    %v1057 = vld [vmem:[#allocation9 + $0x1f8] sm:$0xff]
    %v1058 = vld [vmem:[#allocation11] sm:$0xff]
    %v1060 = vperm.slane %v1058, 0
    %v1061 = vperm.slane %v1058, 1
    %v1062 = vperm.slane %v1058, 2
    %v1063 = vperm.slane %v1058, 3
    %v1064 = vperm.slane %v1058, 4
    %v1065 = vperm.slane %v1058, 5
    %v1066 = vperm.slane %v1058, 6
    %v1067 = vperm.slane %v1058, 7
    %v1140 = vunpack.c.l.b16 %v994
    %v1141 = vunpack.c.h.b16 %v994
    %v1142 = vunpack.c.l.b16 %v995
    %v1143 = vunpack.c.h.b16 %v995
    %v1144 = vunpack.c.l.b16 %v996
    %v1145 = vunpack.c.h.b16 %v996
    %v1146 = vunpack.c.l.b16 %v997
    %v1147 = vunpack.c.h.b16 %v997
    %v1148 = vunpack.c.l.b16 %v998
    %v1149 = vunpack.c.h.b16 %v998
    %v1150 = vunpack.c.l.b16 %v999
    %v1151 = vunpack.c.h.b16 %v999
    %v1152 = vunpack.c.l.b16 %v1000
    %v1153 = vunpack.c.h.b16 %v1000
    %v1154 = vunpack.c.l.b16 %v1001
    %v1155 = vunpack.c.h.b16 %v1001
    %v1156 = vunpack.c.l.b16 %v1002
    %v1157 = vunpack.c.h.b16 %v1002
    %v1158 = vunpack.c.l.b16 %v1003
    %v1159 = vunpack.c.h.b16 %v1003
    %v1160 = vunpack.c.l.b16 %v1004
    %v1161 = vunpack.c.h.b16 %v1004
    %v1162 = vunpack.c.l.b16 %v1005
    %v1163 = vunpack.c.h.b16 %v1005
    %v1164 = vunpack.c.l.b16 %v1006
    %v1165 = vunpack.c.h.b16 %v1006
    %v1166 = vunpack.c.l.b16 %v1007
    %v1167 = vunpack.c.h.b16 %v1007
    %v1168 = vunpack.c.l.b16 %v1008
    %v1169 = vunpack.c.h.b16 %v1008
    %v1170 = vunpack.c.l.b16 %v1009
    %v1171 = vunpack.c.h.b16 %v1009
    %v1172 = vunpack.c.l.b16 %v1010
    %v1173 = vunpack.c.h.b16 %v1010
    %v1174 = vunpack.c.l.b16 %v1011
    %v1175 = vunpack.c.h.b16 %v1011
    %v1176 = vunpack.c.l.b16 %v1012
    %v1177 = vunpack.c.h.b16 %v1012
    %v1178 = vunpack.c.l.b16 %v1013
    %v1179 = vunpack.c.h.b16 %v1013
    %v1180 = vunpack.c.l.b16 %v1014
    %v1181 = vunpack.c.h.b16 %v1014
    %v1182 = vunpack.c.l.b16 %v1015
    %v1183 = vunpack.c.h.b16 %v1015
    %v1184 = vunpack.c.l.b16 %v1016
    %v1185 = vunpack.c.h.b16 %v1016
    %v1186 = vunpack.c.l.b16 %v1017
    %v1187 = vunpack.c.h.b16 %v1017
    %v1188 = vunpack.c.l.b16 %v1018
    %v1189 = vunpack.c.h.b16 %v1018
    %v1190 = vunpack.c.l.b16 %v1019
    %v1191 = vunpack.c.h.b16 %v1019
    %v1192 = vunpack.c.l.b16 %v1020
    %v1193 = vunpack.c.h.b16 %v1020
    %v1194 = vunpack.c.l.b16 %v1021
    %v1195 = vunpack.c.h.b16 %v1021
    %v1196 = vunpack.c.l.b16 %v1022
    %v1197 = vunpack.c.h.b16 %v1022
    %v1198 = vunpack.c.l.b16 %v1023
    %v1199 = vunpack.c.h.b16 %v1023
    %v1200 = vunpack.c.l.b16 %v1024
    %v1201 = vunpack.c.h.b16 %v1024
    %v1202 = vunpack.c.l.b16 %v1025
    %v1203 = vunpack.c.h.b16 %v1025
    %v1204 = vunpack.c.l.b16 %v1026
    %v1205 = vunpack.c.h.b16 %v1026
    %v1206 = vunpack.c.l.b16 %v1027
    %v1207 = vunpack.c.h.b16 %v1027
    %v1208 = vunpack.c.l.b16 %v1028
    %v1209 = vunpack.c.h.b16 %v1028
    %v1210 = vunpack.c.l.b16 %v1029
    %v1211 = vunpack.c.h.b16 %v1029
    %v1212 = vunpack.c.l.b16 %v1030
    %v1213 = vunpack.c.h.b16 %v1030
    %v1214 = vunpack.c.l.b16 %v1031
    %v1215 = vunpack.c.h.b16 %v1031
    %v1216 = vunpack.c.l.b16 %v1032
    %v1217 = vunpack.c.h.b16 %v1032
    %v1218 = vunpack.c.l.b16 %v1033
    %v1219 = vunpack.c.h.b16 %v1033
    %v1220 = vunpack.c.l.b16 %v1034
    %v1221 = vunpack.c.h.b16 %v1034
    %v1222 = vunpack.c.l.b16 %v1035
    %v1223 = vunpack.c.h.b16 %v1035
    %v1224 = vunpack.c.l.b16 %v1036
    %v1225 = vunpack.c.h.b16 %v1036
    %v1226 = vunpack.c.l.b16 %v1037
    %v1227 = vunpack.c.h.b16 %v1037
    %v1228 = vunpack.c.l.b16 %v1038
    %v1229 = vunpack.c.h.b16 %v1038
    %v1230 = vunpack.c.l.b16 %v1039
    %v1231 = vunpack.c.h.b16 %v1039
    %v1232 = vunpack.c.l.b16 %v1040
    %v1233 = vunpack.c.h.b16 %v1040
    %v1234 = vunpack.c.l.b16 %v1041
    %v1235 = vunpack.c.h.b16 %v1041
    %v1236 = vunpack.c.l.b16 %v1042
    %v1237 = vunpack.c.h.b16 %v1042
    %v1238 = vunpack.c.l.b16 %v1043
    %v1239 = vunpack.c.h.b16 %v1043
    %v1240 = vunpack.c.l.b16 %v1044
    %v1241 = vunpack.c.h.b16 %v1044
    %v1242 = vunpack.c.l.b16 %v1045
    %v1243 = vunpack.c.h.b16 %v1045
    %v1244 = vunpack.c.l.b16 %v1046
    %v1245 = vunpack.c.h.b16 %v1046
    %v1246 = vunpack.c.l.b16 %v1047
    %v1247 = vunpack.c.h.b16 %v1047
    %v1248 = vunpack.c.l.b16 %v1048
    %v1249 = vunpack.c.h.b16 %v1048
    %v1250 = vunpack.c.l.b16 %v1049
    %v1251 = vunpack.c.h.b16 %v1049
    %v1252 = vunpack.c.l.b16 %v1050
    %v1253 = vunpack.c.h.b16 %v1050
    %v1254 = vunpack.c.l.b16 %v1051
    %v1255 = vunpack.c.h.b16 %v1051
    %v1256 = vunpack.c.l.b16 %v1052
    %v1257 = vunpack.c.h.b16 %v1052
    %v1258 = vunpack.c.l.b16 %v1053
    %v1259 = vunpack.c.h.b16 %v1053
    %v1260 = vunpack.c.l.b16 %v1054
    %v1261 = vunpack.c.h.b16 %v1054
    %v1262 = vunpack.c.l.b16 %v1055
    %v1263 = vunpack.c.h.b16 %v1055
    %v1264 = vunpack.c.l.b16 %v1056
    %v1265 = vunpack.c.h.b16 %v1056
    %v1266 = vunpack.c.l.b16 %v1057
    %v1267 = vunpack.c.h.b16 %v1057
    %v1268 = vpack.c.b16 %v1148, %v1140
    %v1269 = vpack.c.b16 %v1149, %v1141
    %v1270 = vpack.c.b16 %v1150, %v1142
    %v1271 = vpack.c.b16 %v1151, %v1143
    %v1272 = vpack.c.b16 %v1152, %v1144
    %v1273 = vpack.c.b16 %v1153, %v1145
    %v1274 = vpack.c.b16 %v1154, %v1146
    %v1275 = vpack.c.b16 %v1155, %v1147
    %v1276 = vpack.c.b16 %v1164, %v1156
    %v1277 = vpack.c.b16 %v1165, %v1157
    %v1278 = vpack.c.b16 %v1166, %v1158
    %v1279 = vpack.c.b16 %v1167, %v1159
    %v1280 = vpack.c.b16 %v1168, %v1160
    %v1281 = vpack.c.b16 %v1169, %v1161
    %v1282 = vpack.c.b16 %v1170, %v1162
    %v1283 = vpack.c.b16 %v1171, %v1163
    %v1284 = vpack.c.b16 %v1180, %v1172
    %v1285 = vpack.c.b16 %v1181, %v1173
    %v1286 = vpack.c.b16 %v1182, %v1174
    %v1287 = vpack.c.b16 %v1183, %v1175
    %v1288 = vpack.c.b16 %v1184, %v1176
    %v1289 = vpack.c.b16 %v1185, %v1177
    %v1290 = vpack.c.b16 %v1186, %v1178
    %v1291 = vpack.c.b16 %v1187, %v1179
    %v1292 = vpack.c.b16 %v1196, %v1188
    %v1293 = vpack.c.b16 %v1197, %v1189
    %v1294 = vpack.c.b16 %v1198, %v1190
    %v1295 = vpack.c.b16 %v1199, %v1191
    %v1296 = vpack.c.b16 %v1200, %v1192
    %v1297 = vpack.c.b16 %v1201, %v1193
    %v1298 = vpack.c.b16 %v1202, %v1194
    %v1299 = vpack.c.b16 %v1203, %v1195
    %v1300 = vpack.c.b16 %v1212, %v1204
    %v1301 = vpack.c.b16 %v1213, %v1205
    %v1302 = vpack.c.b16 %v1214, %v1206
    %v1303 = vpack.c.b16 %v1215, %v1207
    %v1304 = vpack.c.b16 %v1216, %v1208
    %v1305 = vpack.c.b16 %v1217, %v1209
    %v1306 = vpack.c.b16 %v1218, %v1210
    %v1307 = vpack.c.b16 %v1219, %v1211
    %v1308 = vpack.c.b16 %v1228, %v1220
    %v1309 = vpack.c.b16 %v1229, %v1221
    %v1310 = vpack.c.b16 %v1230, %v1222
    %v1311 = vpack.c.b16 %v1231, %v1223
    %v1312 = vpack.c.b16 %v1232, %v1224
    %v1313 = vpack.c.b16 %v1233, %v1225
    %v1314 = vpack.c.b16 %v1234, %v1226
    %v1315 = vpack.c.b16 %v1235, %v1227
    %v1316 = vpack.c.b16 %v1244, %v1236
    %v1317 = vpack.c.b16 %v1245, %v1237
    %v1318 = vpack.c.b16 %v1246, %v1238
    %v1319 = vpack.c.b16 %v1247, %v1239
    %v1320 = vpack.c.b16 %v1248, %v1240
    %v1321 = vpack.c.b16 %v1249, %v1241
    %v1322 = vpack.c.b16 %v1250, %v1242
    %v1323 = vpack.c.b16 %v1251, %v1243
    %v1324 = vpack.c.b16 %v1260, %v1252
    %v1325 = vpack.c.b16 %v1261, %v1253
    %v1326 = vpack.c.b16 %v1262, %v1254
    %v1327 = vpack.c.b16 %v1263, %v1255
    %v1328 = vpack.c.b16 %v1264, %v1256
    %v1329 = vpack.c.b16 %v1265, %v1257
    %v1330 = vpack.c.b16 %v1266, %v1258
    %v1331 = vpack.c.b16 %v1267, %v1259
    %1396 = vmatpush.bf16.msra.mxu0 %v1324
    %1397 = vmatpush.bf16.msra.mxu0 %v1316
    %1398 = vmatpush.bf16.msra.mxu0 %v1308
    %1399 = vmatpush.bf16.msra.mxu0 %v1300
    %1400 = vmatpush.bf16.msra.mxu0 %v1292
    %1401 = vmatpush.bf16.msra.mxu0 %v1284
    %1402 = vmatpush.bf16.msra.mxu0 %v1276
    %1403 = vmatpush.bf16.msra.mxu0 %v1268
    %1404 = vmatmul.bf16.gmra.mxu0 %v992
    %v1405 = vpop.f32.mrf.mxu0
    %v1406 = vadd.f32 %v1060, %v1405
    %v1407 = vpop.f32.mrf.mxu0
    %v1408 = vadd.f32 %v1060, %v1407
    %1409 = vmatmul.bf16.gmra.mxu0 %v993
    %v1410 = vpop.f32.mrf.mxu0
    %v1411 = vadd.f32 %v1060, %v1410
    %v1412 = vpop.f32.mrf.mxu0
    %v1413 = vadd.f32 %v1060, %v1412
    %1414 = vdwg.mxu0
    %1415 = vmatpush.bf16.msra.mxu0 %v1325
    %1416 = vmatpush.bf16.msra.mxu0 %v1317
    %1417 = vmatpush.bf16.msra.mxu0 %v1309
    %1418 = vmatpush.bf16.msra.mxu0 %v1301
    %1419 = vmatpush.bf16.msra.mxu0 %v1293
    %1420 = vmatpush.bf16.msra.mxu0 %v1285
    %1421 = vmatpush.bf16.msra.mxu0 %v1277
    %1422 = vmatpush.bf16.msra.mxu0 %v1269
    %1423 = vmatmul.bf16.gmra.mxu0 %v992
    %v1424 = vpop.f32.mrf.mxu0
    %v1425 = vadd.f32 %v1061, %v1424
    %v1426 = vpop.f32.mrf.mxu0
    %v1427 = vadd.f32 %v1061, %v1426
    %1428 = vmatmul.bf16.gmra.mxu0 %v993
    %v1429 = vpop.f32.mrf.mxu0
    %v1430 = vadd.f32 %v1061, %v1429
    %v1431 = vpop.f32.mrf.mxu0
    %v1432 = vadd.f32 %v1061, %v1431
    %1433 = vdwg.mxu0
    %1434 = vmatpush.bf16.msra.mxu0 %v1326
    %1435 = vmatpush.bf16.msra.mxu0 %v1318
    %1436 = vmatpush.bf16.msra.mxu0 %v1310
    %1437 = vmatpush.bf16.msra.mxu0 %v1302
    %1438 = vmatpush.bf16.msra.mxu0 %v1294
    %1439 = vmatpush.bf16.msra.mxu0 %v1286
    %1440 = vmatpush.bf16.msra.mxu0 %v1278
    %1441 = vmatpush.bf16.msra.mxu0 %v1270
    %1442 = vmatmul.bf16.gmra.mxu0 %v992
    %v1443 = vpop.f32.mrf.mxu0
    %v1444 = vadd.f32 %v1062, %v1443
    %v1445 = vpop.f32.mrf.mxu0
    %v1446 = vadd.f32 %v1062, %v1445
    %1447 = vmatmul.bf16.gmra.mxu0 %v993
    %v1448 = vpop.f32.mrf.mxu0
    %v1449 = vadd.f32 %v1062, %v1448
    %v1450 = vpop.f32.mrf.mxu0
    %v1451 = vadd.f32 %v1062, %v1450
    %1452 = vdwg.mxu0
    %1453 = vmatpush.bf16.msra.mxu0 %v1327
    %1454 = vmatpush.bf16.msra.mxu0 %v1319
    %1455 = vmatpush.bf16.msra.mxu0 %v1311
    %1456 = vmatpush.bf16.msra.mxu0 %v1303
    %1457 = vmatpush.bf16.msra.mxu0 %v1295
    %1458 = vmatpush.bf16.msra.mxu0 %v1287
    %1459 = vmatpush.bf16.msra.mxu0 %v1279
    %1460 = vmatpush.bf16.msra.mxu0 %v1271
    %1461 = vmatmul.bf16.gmra.mxu0 %v992
    %v1462 = vpop.f32.mrf.mxu0
    %v1463 = vadd.f32 %v1063, %v1462
    %v1464 = vpop.f32.mrf.mxu0
    %v1465 = vadd.f32 %v1063, %v1464
    %1466 = vmatmul.bf16.gmra.mxu0 %v993
    %v1467 = vpop.f32.mrf.mxu0
    %v1468 = vadd.f32 %v1063, %v1467
    %v1469 = vpop.f32.mrf.mxu0
    %v1470 = vadd.f32 %v1063, %v1469
    %1471 = vdwg.mxu0
    %1472 = vmatpush.bf16.msra.mxu0 %v1328
    %1473 = vmatpush.bf16.msra.mxu0 %v1320
    %1474 = vmatpush.bf16.msra.mxu0 %v1312
    %1475 = vmatpush.bf16.msra.mxu0 %v1304
    %1476 = vmatpush.bf16.msra.mxu0 %v1296
    %1477 = vmatpush.bf16.msra.mxu0 %v1288
    %1478 = vmatpush.bf16.msra.mxu0 %v1280
    %1479 = vmatpush.bf16.msra.mxu0 %v1272
    %1480 = vmatmul.bf16.gmra.mxu0 %v992
    %v1481 = vpop.f32.mrf.mxu0
    %v1482 = vadd.f32 %v1064, %v1481
    %v1483 = vpop.f32.mrf.mxu0
    %v1484 = vadd.f32 %v1064, %v1483
    %1485 = vmatmul.bf16.gmra.mxu0 %v993
    %v1486 = vpop.f32.mrf.mxu0
    %v1487 = vadd.f32 %v1064, %v1486
    %v1488 = vpop.f32.mrf.mxu0
    %v1489 = vadd.f32 %v1064, %v1488
    %1490 = vdwg.mxu0
    %1491 = vmatpush.bf16.msra.mxu0 %v1329
    %1492 = vmatpush.bf16.msra.mxu0 %v1321
    %1493 = vmatpush.bf16.msra.mxu0 %v1313
    %1494 = vmatpush.bf16.msra.mxu0 %v1305
    %1495 = vmatpush.bf16.msra.mxu0 %v1297
    %1496 = vmatpush.bf16.msra.mxu0 %v1289
    %1497 = vmatpush.bf16.msra.mxu0 %v1281
    %1498 = vmatpush.bf16.msra.mxu0 %v1273
    %1499 = vmatmul.bf16.gmra.mxu0 %v992
    %v1500 = vpop.f32.mrf.mxu0
    %v1501 = vadd.f32 %v1065, %v1500
    %v1502 = vpop.f32.mrf.mxu0
    %v1503 = vadd.f32 %v1065, %v1502
    %1504 = vmatmul.bf16.gmra.mxu0 %v993
    %v1505 = vpop.f32.mrf.mxu0
    %v1506 = vadd.f32 %v1065, %v1505
    %v1507 = vpop.f32.mrf.mxu0
    %v1508 = vadd.f32 %v1065, %v1507
    %1509 = vdwg.mxu0
    %1510 = vmatpush.bf16.msra.mxu0 %v1330
    %1511 = vmatpush.bf16.msra.mxu0 %v1322
    %1512 = vmatpush.bf16.msra.mxu0 %v1314
    %1513 = vmatpush.bf16.msra.mxu0 %v1306
    %1514 = vmatpush.bf16.msra.mxu0 %v1298
    %1515 = vmatpush.bf16.msra.mxu0 %v1290
    %1516 = vmatpush.bf16.msra.mxu0 %v1282
    %1517 = vmatpush.bf16.msra.mxu0 %v1274
    %1518 = vmatmul.bf16.gmra.mxu0 %v992
    %v1519 = vpop.f32.mrf.mxu0
    %v1520 = vadd.f32 %v1066, %v1519
    %v1521 = vpop.f32.mrf.mxu0
    %v1522 = vadd.f32 %v1066, %v1521
    %1523 = vmatmul.bf16.gmra.mxu0 %v993
    %v1524 = vpop.f32.mrf.mxu0
    %v1525 = vadd.f32 %v1066, %v1524
    %v1526 = vpop.f32.mrf.mxu0
    %v1527 = vadd.f32 %v1066, %v1526
    %1528 = vdwg.mxu0
    %1529 = vmatpush.bf16.msra.mxu0 %v1331
    %1530 = vmatpush.bf16.msra.mxu0 %v1323
    %1531 = vmatpush.bf16.msra.mxu0 %v1315
    %1532 = vmatpush.bf16.msra.mxu0 %v1307
    %1533 = vmatpush.bf16.msra.mxu0 %v1299
    %1534 = vmatpush.bf16.msra.mxu0 %v1291
    %1535 = vmatpush.bf16.msra.mxu0 %v1283
    %1536 = vmatpush.bf16.msra.mxu0 %v1275
    %1537 = vmatmul.bf16.gmra.mxu0 %v992
    %v1538 = vpop.f32.mrf.mxu0
    %v1539 = vadd.f32 %v1067, %v1538
    %v1540 = vpop.f32.mrf.mxu0
    %v1541 = vadd.f32 %v1067, %v1540
    %1542 = vmatmul.bf16.gmra.mxu0 %v993
    %v1543 = vpop.f32.mrf.mxu0
    %v1544 = vadd.f32 %v1067, %v1543
    %v1545 = vpop.f32.mrf.mxu0
    %v1546 = vadd.f32 %v1067, %v1545
    %1547 = vdwg.mxu0
    %v1580 = vrot.slane %v1425, 6
    %v1581 = vrot.slane %v1444, 4
    %v1582 = vrot.slane %v1463, 2
    %v1583 = vrot.slane %v1501, 6
    %v1584 = vrot.slane %v1520, 4
    %v1585 = vrot.slane %v1539, 2
    %v1586 = vrot.slane %v1427, 6
    %v1587 = vrot.slane %v1446, 4
    %v1588 = vrot.slane %v1465, 2
    %v1589 = vrot.slane %v1503, 6
    %v1590 = vrot.slane %v1522, 4
    %v1591 = vrot.slane %v1541, 2
    %v1592 = vrot.slane %v1430, 6
    %v1593 = vrot.slane %v1449, 4
    %v1594 = vrot.slane %v1468, 2
    %v1595 = vrot.slane %v1506, 6
    %v1596 = vrot.slane %v1525, 4
    %v1597 = vrot.slane %v1544, 2
    %v1598 = vrot.slane %v1432, 6
    %v1599 = vrot.slane %v1451, 4
    %v1600 = vrot.slane %v1470, 2
    %v1601 = vrot.slane %v1508, 6
    %v1602 = vrot.slane %v1527, 4
    %v1603 = vrot.slane %v1546, 2
    %vm1604 = vcmask 1041408
    %v1605 = vsel %vm1604, %v1406, %v1580
    %vm1606 = vcmask 1045508
    %v1607 = vsel %vm1606, %v1581, %v1582
    %vm1608 = vcmask 1043456
    %v1609 = vsel %vm1608, %v1605, %v1607
    %v1610 = vsel %vm1604, %v1482, %v1583
    %v1611 = vsel %vm1606, %v1584, %v1585
    %v1612 = vsel %vm1608, %v1610, %v1611
    %vm1613 = vcmask 1043458
    %v1614 = vsel %vm1613, %v1406, %v1580
    %vm1615 = vcmask 1045504
    %v1616 = vsel %vm1615, %v1582, %v1581
    %vm1617 = vcmask 1045506
    %v1618 = vsel %vm1617, %v1614, %v1616
    %v1619 = vrot.slane %v1618, 2
    %v1620 = vsel %vm1613, %v1482, %v1583
    %v1621 = vsel %vm1615, %v1585, %v1584
    %v1622 = vsel %vm1617, %v1620, %v1621
    %v1623 = vrot.slane %v1622, 2
    %v1624 = vsel %vm1606, %v1406, %v1580
    %v1625 = vsel %vm1604, %v1581, %v1582
    %v1626 = vsel %vm1608, %v1625, %v1624
    %v1627 = vrot.slane %v1626, 4
    %v1628 = vsel %vm1606, %v1482, %v1583
    %v1629 = vsel %vm1604, %v1584, %v1585
    %v1630 = vsel %vm1608, %v1629, %v1628
    %v1631 = vrot.slane %v1630, 4
    %v1632 = vsel %vm1615, %v1580, %v1406
    %v1633 = vsel %vm1613, %v1581, %v1582
    %v1634 = vsel %vm1617, %v1633, %v1632
    %v1635 = vrot.slane %v1634, 6
    %v1636 = vsel %vm1615, %v1583, %v1482
    %v1637 = vsel %vm1613, %v1584, %v1585
    %v1638 = vsel %vm1617, %v1637, %v1636
    %v1639 = vrot.slane %v1638, 6
    %v1640 = vsel %vm1604, %v1408, %v1586
    %v1641 = vsel %vm1606, %v1587, %v1588
    %v1642 = vsel %vm1608, %v1640, %v1641
    %v1643 = vsel %vm1604, %v1484, %v1589
    %v1644 = vsel %vm1606, %v1590, %v1591
    %v1645 = vsel %vm1608, %v1643, %v1644
    %v1646 = vsel %vm1613, %v1408, %v1586
    %v1647 = vsel %vm1615, %v1588, %v1587
    %v1648 = vsel %vm1617, %v1646, %v1647
    %v1649 = vrot.slane %v1648, 2
    %v1650 = vsel %vm1613, %v1484, %v1589
    %v1651 = vsel %vm1615, %v1591, %v1590
    %v1652 = vsel %vm1617, %v1650, %v1651
    %v1653 = vrot.slane %v1652, 2
    %v1654 = vsel %vm1606, %v1408, %v1586
    %v1655 = vsel %vm1604, %v1587, %v1588
    %v1656 = vsel %vm1608, %v1655, %v1654
    %v1657 = vrot.slane %v1656, 4
    %v1658 = vsel %vm1606, %v1484, %v1589
    %v1659 = vsel %vm1604, %v1590, %v1591
    %v1660 = vsel %vm1608, %v1659, %v1658
    %v1661 = vrot.slane %v1660, 4
    %v1662 = vsel %vm1615, %v1586, %v1408
    %v1663 = vsel %vm1613, %v1587, %v1588
    %v1664 = vsel %vm1617, %v1663, %v1662
    %v1665 = vrot.slane %v1664, 6
    %v1666 = vsel %vm1615, %v1589, %v1484
    %v1667 = vsel %vm1613, %v1590, %v1591
    %v1668 = vsel %vm1617, %v1667, %v1666
    %v1669 = vrot.slane %v1668, 6
    %v1670 = vsel %vm1604, %v1411, %v1592
    %v1671 = vsel %vm1606, %v1593, %v1594
    %v1672 = vsel %vm1608, %v1670, %v1671
    %v1673 = vsel %vm1604, %v1487, %v1595
    %v1674 = vsel %vm1606, %v1596, %v1597
    %v1675 = vsel %vm1608, %v1673, %v1674
    %v1676 = vsel %vm1613, %v1411, %v1592
    %v1677 = vsel %vm1615, %v1594, %v1593
    %v1678 = vsel %vm1617, %v1676, %v1677
    %v1679 = vrot.slane %v1678, 2
    %v1680 = vsel %vm1613, %v1487, %v1595
    %v1681 = vsel %vm1615, %v1597, %v1596
    %v1682 = vsel %vm1617, %v1680, %v1681
    %v1683 = vrot.slane %v1682, 2
    %v1684 = vsel %vm1606, %v1411, %v1592
    %v1685 = vsel %vm1604, %v1593, %v1594
    %v1686 = vsel %vm1608, %v1685, %v1684
    %v1687 = vrot.slane %v1686, 4
    %v1688 = vsel %vm1606, %v1487, %v1595
    %v1689 = vsel %vm1604, %v1596, %v1597
    %v1690 = vsel %vm1608, %v1689, %v1688
    %v1691 = vrot.slane %v1690, 4
    %v1692 = vsel %vm1615, %v1592, %v1411
    %v1693 = vsel %vm1613, %v1593, %v1594
    %v1694 = vsel %vm1617, %v1693, %v1692
    %v1695 = vrot.slane %v1694, 6
    %v1696 = vsel %vm1615, %v1595, %v1487
    %v1697 = vsel %vm1613, %v1596, %v1597
    %v1698 = vsel %vm1617, %v1697, %v1696
    %v1699 = vrot.slane %v1698, 6
    %v1700 = vsel %vm1604, %v1413, %v1598
    %v1701 = vsel %vm1606, %v1599, %v1600
    %v1702 = vsel %vm1608, %v1700, %v1701
    %v1703 = vsel %vm1604, %v1489, %v1601
    %v1704 = vsel %vm1606, %v1602, %v1603
    %v1705 = vsel %vm1608, %v1703, %v1704
    %v1706 = vsel %vm1613, %v1413, %v1598
    %v1707 = vsel %vm1615, %v1600, %v1599
    %v1708 = vsel %vm1617, %v1706, %v1707
    %v1709 = vrot.slane %v1708, 2
    %v1710 = vsel %vm1613, %v1489, %v1601
    %v1711 = vsel %vm1615, %v1603, %v1602
    %v1712 = vsel %vm1617, %v1710, %v1711
    %v1713 = vrot.slane %v1712, 2
    %v1714 = vsel %vm1606, %v1413, %v1598
    %v1715 = vsel %vm1604, %v1599, %v1600
    %v1716 = vsel %vm1608, %v1715, %v1714
    %v1717 = vrot.slane %v1716, 4
    %v1718 = vsel %vm1606, %v1489, %v1601
    %v1719 = vsel %vm1604, %v1602, %v1603
    %v1720 = vsel %vm1608, %v1719, %v1718
    %v1721 = vrot.slane %v1720, 4
    %v1722 = vsel %vm1615, %v1598, %v1413
    %v1723 = vsel %vm1613, %v1599, %v1600
    %v1724 = vsel %vm1617, %v1723, %v1722
    %v1725 = vrot.slane %v1724, 6
    %v1726 = vsel %vm1615, %v1601, %v1489
    %v1727 = vsel %vm1613, %v1602, %v1603
    %v1728 = vsel %vm1617, %v1727, %v1726
    %v1729 = vrot.slane %v1728, 6
    %1730 = vst [vmem:[#allocation1] ss:$4 sm:$0xff] %v1609
    %v1731 = vld.sshfl [vmem:[#allocation1] sm:$0xff pattern:$0x73625140]
    %v1732 = vld.sshfl [vmem:[#allocation1 + $0x8] sm:$0xff pattern:$0x73625140]
    %v1733 = vld.sshfl [vmem:[#allocation1 + $0x10] sm:$0xff pattern:$0x73625140]
    %v1734 = vld.sshfl [vmem:[#allocation1 + $0x18] sm:$0xff pattern:$0x73625140]
    %s1735 = scalar_lea.vmem [#allocation1], 32
    %1736 = vst [vmem:[%s1735] ss:$4 sm:$0xff] %v1619
    %v1737 = vld.sshfl [vmem:[#allocation1 + $0x20] sm:$0xff pattern:$0x73625140]
    %v1738 = vld.sshfl [vmem:[#allocation1 + $0x28] sm:$0xff pattern:$0x73625140]
    %v1739 = vld.sshfl [vmem:[#allocation1 + $0x30] sm:$0xff pattern:$0x73625140]
    %v1740 = vld.sshfl [vmem:[#allocation1 + $0x38] sm:$0xff pattern:$0x73625140]
    %1741 = vst [vmem:[#allocation1] ss:$4 sm:$0xff] %v1627
    %v1742 = vld.sshfl [vmem:[#allocation1] sm:$0xff pattern:$0x73625140]
    %v1743 = vld.sshfl [vmem:[#allocation1 + $0x8] sm:$0xff pattern:$0x73625140]
    %v1744 = vld.sshfl [vmem:[#allocation1 + $0x10] sm:$0xff pattern:$0x73625140]
    %v1745 = vld.sshfl [vmem:[#allocation1 + $0x18] sm:$0xff pattern:$0x73625140]
    %1746 = vst [vmem:[%s1735] ss:$4 sm:$0xff] %v1635
    %v1747 = vld.sshfl [vmem:[#allocation1 + $0x20] sm:$0xff pattern:$0x73625140]
    %v1748 = vld.sshfl [vmem:[#allocation1 + $0x28] sm:$0xff pattern:$0x73625140]
    %v1749 = vld.sshfl [vmem:[#allocation1 + $0x30] sm:$0xff pattern:$0x73625140]
    %v1750 = vld.sshfl [vmem:[#allocation1 + $0x38] sm:$0xff pattern:$0x73625140]
    %1751 = vst [vmem:[#allocation1] ss:$4 sm:$0xff] %v1642
    %v1752 = vld.sshfl [vmem:[#allocation1] sm:$0xff pattern:$0x73625140]
    %v1753 = vld.sshfl [vmem:[#allocation1 + $0x8] sm:$0xff pattern:$0x73625140]
    %v1754 = vld.sshfl [vmem:[#allocation1 + $0x10] sm:$0xff pattern:$0x73625140]
    %v1755 = vld.sshfl [vmem:[#allocation1 + $0x18] sm:$0xff pattern:$0x73625140]
    %1756 = vst [vmem:[%s1735] ss:$4 sm:$0xff] %v1649
    %v1757 = vld.sshfl [vmem:[#allocation1 + $0x20] sm:$0xff pattern:$0x73625140]
    %v1758 = vld.sshfl [vmem:[#allocation1 + $0x28] sm:$0xff pattern:$0x73625140]
    %v1759 = vld.sshfl [vmem:[#allocation1 + $0x30] sm:$0xff pattern:$0x73625140]
    %v1760 = vld.sshfl [vmem:[#allocation1 + $0x38] sm:$0xff pattern:$0x73625140]
    %1761 = vst [vmem:[#allocation1] ss:$4 sm:$0xff] %v1657
    %v1762 = vld.sshfl [vmem:[#allocation1] sm:$0xff pattern:$0x73625140]
    %v1763 = vld.sshfl [vmem:[#allocation1 + $0x8] sm:$0xff pattern:$0x73625140]
    %v1764 = vld.sshfl [vmem:[#allocation1 + $0x10] sm:$0xff pattern:$0x73625140]
    %v1765 = vld.sshfl [vmem:[#allocation1 + $0x18] sm:$0xff pattern:$0x73625140]
    %1766 = vst [vmem:[%s1735] ss:$4 sm:$0xff] %v1665
    %v1767 = vld.sshfl [vmem:[#allocation1 + $0x20] sm:$0xff pattern:$0x73625140]
    %v1768 = vld.sshfl [vmem:[#allocation1 + $0x28] sm:$0xff pattern:$0x73625140]
    %v1769 = vld.sshfl [vmem:[#allocation1 + $0x30] sm:$0xff pattern:$0x73625140]
    %v1770 = vld.sshfl [vmem:[#allocation1 + $0x38] sm:$0xff pattern:$0x73625140]
    %1771 = vst [vmem:[#allocation1] ss:$4 sm:$0xff] %v1672
    %v1772 = vld.sshfl [vmem:[#allocation1] sm:$0xff pattern:$0x73625140]
    %v1773 = vld.sshfl [vmem:[#allocation1 + $0x8] sm:$0xff pattern:$0x73625140]
    %v1774 = vld.sshfl [vmem:[#allocation1 + $0x10] sm:$0xff pattern:$0x73625140]
    %v1775 = vld.sshfl [vmem:[#allocation1 + $0x18] sm:$0xff pattern:$0x73625140]
    %1776 = vst [vmem:[%s1735] ss:$4 sm:$0xff] %v1679
    %v1777 = vld.sshfl [vmem:[#allocation1 + $0x20] sm:$0xff pattern:$0x73625140]
    %v1778 = vld.sshfl [vmem:[#allocation1 + $0x28] sm:$0xff pattern:$0x73625140]
    %v1779 = vld.sshfl [vmem:[#allocation1 + $0x30] sm:$0xff pattern:$0x73625140]
    %v1780 = vld.sshfl [vmem:[#allocation1 + $0x38] sm:$0xff pattern:$0x73625140]
    %1781 = vst [vmem:[#allocation1] ss:$4 sm:$0xff] %v1687
    %v1782 = vld.sshfl [vmem:[#allocation1] sm:$0xff pattern:$0x73625140]
    %v1783 = vld.sshfl [vmem:[#allocation1 + $0x8] sm:$0xff pattern:$0x73625140]
    %v1784 = vld.sshfl [vmem:[#allocation1 + $0x10] sm:$0xff pattern:$0x73625140]
    %v1785 = vld.sshfl [vmem:[#allocation1 + $0x18] sm:$0xff pattern:$0x73625140]
    %1786 = vst [vmem:[%s1735] ss:$4 sm:$0xff] %v1695
    %v1787 = vld.sshfl [vmem:[#allocation1 + $0x20] sm:$0xff pattern:$0x73625140]
    %v1788 = vld.sshfl [vmem:[#allocation1 + $0x28] sm:$0xff pattern:$0x73625140]
    %v1789 = vld.sshfl [vmem:[#allocation1 + $0x30] sm:$0xff pattern:$0x73625140]
    %v1790 = vld.sshfl [vmem:[#allocation1 + $0x38] sm:$0xff pattern:$0x73625140]
    %1791 = vst [vmem:[#allocation1] ss:$4 sm:$0xff] %v1702
    %v1792 = vld.sshfl [vmem:[#allocation1] sm:$0xff pattern:$0x73625140]
    %v1793 = vld.sshfl [vmem:[#allocation1 + $0x8] sm:$0xff pattern:$0x73625140]
    %v1794 = vld.sshfl [vmem:[#allocation1 + $0x10] sm:$0xff pattern:$0x73625140]
    %v1795 = vld.sshfl [vmem:[#allocation1 + $0x18] sm:$0xff pattern:$0x73625140]
    %1796 = vst [vmem:[%s1735] ss:$4 sm:$0xff] %v1709
    %v1797 = vld.sshfl [vmem:[#allocation1 + $0x20] sm:$0xff pattern:$0x73625140]
    %v1798 = vld.sshfl [vmem:[#allocation1 + $0x28] sm:$0xff pattern:$0x73625140]
    %v1799 = vld.sshfl [vmem:[#allocation1 + $0x30] sm:$0xff pattern:$0x73625140]
    %v1800 = vld.sshfl [vmem:[#allocation1 + $0x38] sm:$0xff pattern:$0x73625140]
    %1801 = vst [vmem:[#allocation1] ss:$4 sm:$0xff] %v1717
    %v1802 = vld.sshfl [vmem:[#allocation1] sm:$0xff pattern:$0x73625140]
    %v1803 = vld.sshfl [vmem:[#allocation1 + $0x8] sm:$0xff pattern:$0x73625140]
    %v1804 = vld.sshfl [vmem:[#allocation1 + $0x10] sm:$0xff pattern:$0x73625140]
    %v1805 = vld.sshfl [vmem:[#allocation1 + $0x18] sm:$0xff pattern:$0x73625140]
    %1806 = vst [vmem:[%s1735] ss:$4 sm:$0xff] %v1725
    %v1807 = vld.sshfl [vmem:[#allocation1 + $0x20] sm:$0xff pattern:$0x73625140]
    %v1808 = vld.sshfl [vmem:[#allocation1 + $0x28] sm:$0xff pattern:$0x73625140]
    %v1809 = vld.sshfl [vmem:[#allocation1 + $0x30] sm:$0xff pattern:$0x73625140]
    %v1810 = vld.sshfl [vmem:[#allocation1 + $0x38] sm:$0xff pattern:$0x73625140]
    %v1875 = vpack.c.bf16 %v1732, %v1731
    %v1876 = vpack.c.bf16 %v1734, %v1733
    %v1877 = vpack.c.bf16 %v1738, %v1737
    %v1878 = vpack.c.bf16 %v1740, %v1739
    %v1879 = vpack.c.bf16 %v1743, %v1742
    %v1880 = vpack.c.bf16 %v1745, %v1744
    %v1881 = vpack.c.bf16 %v1748, %v1747
    %v1882 = vpack.c.bf16 %v1750, %v1749
    %v1883 = vpack.c.bf16 %v1753, %v1752
    %v1884 = vpack.c.bf16 %v1755, %v1754
    %v1885 = vpack.c.bf16 %v1758, %v1757
    %v1886 = vpack.c.bf16 %v1760, %v1759
    %v1887 = vpack.c.bf16 %v1763, %v1762
    %v1888 = vpack.c.bf16 %v1765, %v1764
    %v1889 = vpack.c.bf16 %v1768, %v1767
    %v1890 = vpack.c.bf16 %v1770, %v1769
    %v1891 = vpack.c.bf16 %v1773, %v1772
    %v1892 = vpack.c.bf16 %v1775, %v1774
    %v1893 = vpack.c.bf16 %v1778, %v1777
    %v1894 = vpack.c.bf16 %v1780, %v1779
    %v1895 = vpack.c.bf16 %v1783, %v1782
    %v1896 = vpack.c.bf16 %v1785, %v1784
    %v1897 = vpack.c.bf16 %v1788, %v1787
    %v1898 = vpack.c.bf16 %v1790, %v1789
    %v1899 = vpack.c.bf16 %v1793, %v1792
    %v1900 = vpack.c.bf16 %v1795, %v1794
    %v1901 = vpack.c.bf16 %v1798, %v1797
    %v1902 = vpack.c.bf16 %v1800, %v1799
    %v1903 = vpack.c.bf16 %v1803, %v1802
    %v1904 = vpack.c.bf16 %v1805, %v1804
    %v1905 = vpack.c.bf16 %v1808, %v1807
    %v1906 = vpack.c.bf16 %v1810, %v1809
    %v1939 = vrot.slane %v1875, 3
    %v1940 = vrot.slane %v1876, 6
    %v1941 = vrot.slane %v1876, 1
    %v1942 = vrot.slane %v1877, 3
    %v1943 = vrot.slane %v1878, 6
    %v1944 = vrot.slane %v1878, 1
    %v1945 = vrot.slane %v1879, 3
    %v1946 = vrot.slane %v1880, 6
    %v1947 = vrot.slane %v1880, 1
    %v1948 = vrot.slane %v1881, 3
    %v1949 = vrot.slane %v1882, 6
    %v1950 = vrot.slane %v1882, 1
    %v1951 = vrot.slane %v1883, 3
    %v1952 = vrot.slane %v1884, 6
    %v1953 = vrot.slane %v1884, 1
    %v1954 = vrot.slane %v1885, 3
    %v1955 = vrot.slane %v1886, 6
    %v1956 = vrot.slane %v1886, 1
    %v1957 = vrot.slane %v1887, 3
    %v1958 = vrot.slane %v1888, 6
    %v1959 = vrot.slane %v1888, 1
    %v1960 = vrot.slane %v1889, 3
    %v1961 = vrot.slane %v1890, 6
    %v1962 = vrot.slane %v1890, 1
    %v1963 = vrot.slane %v1891, 3
    %v1964 = vrot.slane %v1892, 6
    %v1965 = vrot.slane %v1892, 1
    %v1966 = vrot.slane %v1893, 3
    %v1967 = vrot.slane %v1894, 6
    %v1968 = vrot.slane %v1894, 1
    %v1969 = vrot.slane %v1895, 3
    %v1970 = vrot.slane %v1896, 6
    %v1971 = vrot.slane %v1896, 1
    %v1972 = vrot.slane %v1897, 3
    %v1973 = vrot.slane %v1898, 6
    %v1974 = vrot.slane %v1898, 1
    %v1975 = vrot.slane %v1899, 3
    %v1976 = vrot.slane %v1900, 6
    %v1977 = vrot.slane %v1900, 1
    %v1978 = vrot.slane %v1901, 3
    %v1979 = vrot.slane %v1902, 6
    %v1980 = vrot.slane %v1902, 1
    %v1981 = vrot.slane %v1903, 3
    %v1982 = vrot.slane %v1904, 6
    %v1983 = vrot.slane %v1904, 1
    %v1984 = vrot.slane %v1905, 3
    %v1985 = vrot.slane %v1906, 6
    %v1986 = vrot.slane %v1906, 1
    %vm1987 = vcmask 1040384
    %v1990 = vsel %vm1987, %v1875, %v1939
    %vm1991 = vcmask 1042434
    %v1994 = vsel %vm1991, %v1940, %v1941
    %v1995 = vsel %vm1604, %v1990, %v1994
    %v1998 = vsel %vm1987, %v1877, %v1942
    %v2001 = vsel %vm1991, %v1943, %v1944
    %v2002 = vsel %vm1604, %v1998, %v2001
    %v2005 = vsel %vm1987, %v1879, %v1945
    %v2008 = vsel %vm1991, %v1946, %v1947
    %v2009 = vsel %vm1604, %v2005, %v2008
    %v2012 = vsel %vm1987, %v1881, %v1948
    %v2015 = vsel %vm1991, %v1949, %v1950
    %v2016 = vsel %vm1604, %v2012, %v2015
    %v2019 = vsel %vm1987, %v1883, %v1951
    %v2022 = vsel %vm1991, %v1952, %v1953
    %v2023 = vsel %vm1604, %v2019, %v2022
    %v2026 = vsel %vm1987, %v1885, %v1954
    %v2029 = vsel %vm1991, %v1955, %v1956
    %v2030 = vsel %vm1604, %v2026, %v2029
    %v2033 = vsel %vm1987, %v1887, %v1957
    %v2036 = vsel %vm1991, %v1958, %v1959
    %v2037 = vsel %vm1604, %v2033, %v2036
    %v2040 = vsel %vm1987, %v1889, %v1960
    %v2043 = vsel %vm1991, %v1961, %v1962
    %v2044 = vsel %vm1604, %v2040, %v2043
    %v2047 = vsel %vm1987, %v1891, %v1963
    %v2050 = vsel %vm1991, %v1964, %v1965
    %v2051 = vsel %vm1604, %v2047, %v2050
    %v2054 = vsel %vm1987, %v1893, %v1966
    %v2057 = vsel %vm1991, %v1967, %v1968
    %v2058 = vsel %vm1604, %v2054, %v2057
    %v2061 = vsel %vm1987, %v1895, %v1969
    %v2064 = vsel %vm1991, %v1970, %v1971
    %v2065 = vsel %vm1604, %v2061, %v2064
    %v2068 = vsel %vm1987, %v1897, %v1972
    %v2071 = vsel %vm1991, %v1973, %v1974
    %v2072 = vsel %vm1604, %v2068, %v2071
    %v2075 = vsel %vm1987, %v1899, %v1975
    %v2078 = vsel %vm1991, %v1976, %v1977
    %v2079 = vsel %vm1604, %v2075, %v2078
    %v2082 = vsel %vm1987, %v1901, %v1978
    %v2085 = vsel %vm1991, %v1979, %v1980
    %v2086 = vsel %vm1604, %v2082, %v2085
    %v2089 = vsel %vm1987, %v1903, %v1981
    %v2092 = vsel %vm1991, %v1982, %v1983
    %v2093 = vsel %vm1604, %v2089, %v2092
    %v2096 = vsel %vm1987, %v1905, %v1984
    %v2099 = vsel %vm1991, %v1985, %v1986
    %v2100 = vsel %vm1604, %v2096, %v2099
    %2117 = vst [vmem:[#allocation12] sm:$0xf] %v1995
    %2118 = vst [vmem:[#allocation12 + $0x4] sm:$0xf] %v2002
    %2119 = vst [vmem:[#allocation12 + $0x8] sm:$0xf] %v2009
    %2120 = vst [vmem:[#allocation12 + $0xc] sm:$0xf] %v2016
    %2121 = vst [vmem:[#allocation12 + $0x10] sm:$0xf] %v2023
    %2122 = vst [vmem:[#allocation12 + $0x14] sm:$0xf] %v2030
    %2123 = vst [vmem:[#allocation12 + $0x18] sm:$0xf] %v2037
    %2124 = vst [vmem:[#allocation12 + $0x1c] sm:$0xf] %v2044
    %2125 = vst [vmem:[#allocation12 + $0x20] sm:$0xf] %v2051
    %2126 = vst [vmem:[#allocation12 + $0x24] sm:$0xf] %v2058
    %2127 = vst [vmem:[#allocation12 + $0x28] sm:$0xf] %v2065
    %2128 = vst [vmem:[#allocation12 + $0x2c] sm:$0xf] %v2072
    %2129 = vst [vmem:[#allocation12 + $0x30] sm:$0xf] %v2079
    %2130 = vst [vmem:[#allocation12 + $0x34] sm:$0xf] %v2086
    %2131 = vst [vmem:[#allocation12 + $0x38] sm:$0xf] %v2093
    %2132 = vst [vmem:[#allocation12 + $0x3c] sm:$0xf] %v2100
    %2133 = vst [vmem:[#allocation1] ss:$4 sm:$0xff] %v1612
    %v2134 = vld.sshfl [vmem:[#allocation1] sm:$0xff pattern:$0x73625140]
    %v2135 = vld.sshfl [vmem:[#allocation1 + $0x8] sm:$0xff pattern:$0x73625140]
    %v2136 = vld.sshfl [vmem:[#allocation1 + $0x10] sm:$0xff pattern:$0x73625140]
    %v2137 = vld.sshfl [vmem:[#allocation1 + $0x18] sm:$0xff pattern:$0x73625140]
    %s2138 = scalar_lea.vmem [#allocation1], 32
    %2139 = vst [vmem:[%s2138] ss:$4 sm:$0xff] %v1623
    %v2140 = vld.sshfl [vmem:[#allocation1 + $0x20] sm:$0xff pattern:$0x73625140]
    %v2141 = vld.sshfl [vmem:[#allocation1 + $0x28] sm:$0xff pattern:$0x73625140]
    %v2142 = vld.sshfl [vmem:[#allocation1 + $0x30] sm:$0xff pattern:$0x73625140]
    %v2143 = vld.sshfl [vmem:[#allocation1 + $0x38] sm:$0xff pattern:$0x73625140]
    %2144 = vst [vmem:[#allocation1] ss:$4 sm:$0xff] %v1631
    %v2145 = vld.sshfl [vmem:[#allocation1] sm:$0xff pattern:$0x73625140]
    %v2146 = vld.sshfl [vmem:[#allocation1 + $0x8] sm:$0xff pattern:$0x73625140]
    %v2147 = vld.sshfl [vmem:[#allocation1 + $0x10] sm:$0xff pattern:$0x73625140]
    %v2148 = vld.sshfl [vmem:[#allocation1 + $0x18] sm:$0xff pattern:$0x73625140]
    %2149 = vst [vmem:[%s2138] ss:$4 sm:$0xff] %v1639
    %v2150 = vld.sshfl [vmem:[#allocation1 + $0x20] sm:$0xff pattern:$0x73625140]
    %v2151 = vld.sshfl [vmem:[#allocation1 + $0x28] sm:$0xff pattern:$0x73625140]
    %v2152 = vld.sshfl [vmem:[#allocation1 + $0x30] sm:$0xff pattern:$0x73625140]
    %v2153 = vld.sshfl [vmem:[#allocation1 + $0x38] sm:$0xff pattern:$0x73625140]
    %2154 = vst [vmem:[#allocation1] ss:$4 sm:$0xff] %v1645
    %v2155 = vld.sshfl [vmem:[#allocation1] sm:$0xff pattern:$0x73625140]
    %v2156 = vld.sshfl [vmem:[#allocation1 + $0x8] sm:$0xff pattern:$0x73625140]
    %v2157 = vld.sshfl [vmem:[#allocation1 + $0x10] sm:$0xff pattern:$0x73625140]
    %v2158 = vld.sshfl [vmem:[#allocation1 + $0x18] sm:$0xff pattern:$0x73625140]
    %2159 = vst [vmem:[%s2138] ss:$4 sm:$0xff] %v1653
    %v2160 = vld.sshfl [vmem:[#allocation1 + $0x20] sm:$0xff pattern:$0x73625140]
    %v2161 = vld.sshfl [vmem:[#allocation1 + $0x28] sm:$0xff pattern:$0x73625140]
    %v2162 = vld.sshfl [vmem:[#allocation1 + $0x30] sm:$0xff pattern:$0x73625140]
    %v2163 = vld.sshfl [vmem:[#allocation1 + $0x38] sm:$0xff pattern:$0x73625140]
    %2164 = vst [vmem:[#allocation1] ss:$4 sm:$0xff] %v1661
    %v2165 = vld.sshfl [vmem:[#allocation1] sm:$0xff pattern:$0x73625140]
    %v2166 = vld.sshfl [vmem:[#allocation1 + $0x8] sm:$0xff pattern:$0x73625140]
    %v2167 = vld.sshfl [vmem:[#allocation1 + $0x10] sm:$0xff pattern:$0x73625140]
    %v2168 = vld.sshfl [vmem:[#allocation1 + $0x18] sm:$0xff pattern:$0x73625140]
    %2169 = vst [vmem:[%s2138] ss:$4 sm:$0xff] %v1669
    %v2170 = vld.sshfl [vmem:[#allocation1 + $0x20] sm:$0xff pattern:$0x73625140]
    %v2171 = vld.sshfl [vmem:[#allocation1 + $0x28] sm:$0xff pattern:$0x73625140]
    %v2172 = vld.sshfl [vmem:[#allocation1 + $0x30] sm:$0xff pattern:$0x73625140]
    %v2173 = vld.sshfl [vmem:[#allocation1 + $0x38] sm:$0xff pattern:$0x73625140]
    %2174 = vst [vmem:[#allocation1] ss:$4 sm:$0xff] %v1675
    %v2175 = vld.sshfl [vmem:[#allocation1] sm:$0xff pattern:$0x73625140]
    %v2176 = vld.sshfl [vmem:[#allocation1 + $0x8] sm:$0xff pattern:$0x73625140]
    %v2177 = vld.sshfl [vmem:[#allocation1 + $0x10] sm:$0xff pattern:$0x73625140]
    %v2178 = vld.sshfl [vmem:[#allocation1 + $0x18] sm:$0xff pattern:$0x73625140]
    %2179 = vst [vmem:[%s2138] ss:$4 sm:$0xff] %v1683
    %v2180 = vld.sshfl [vmem:[#allocation1 + $0x20] sm:$0xff pattern:$0x73625140]
    %v2181 = vld.sshfl [vmem:[#allocation1 + $0x28] sm:$0xff pattern:$0x73625140]
    %v2182 = vld.sshfl [vmem:[#allocation1 + $0x30] sm:$0xff pattern:$0x73625140]
    %v2183 = vld.sshfl [vmem:[#allocation1 + $0x38] sm:$0xff pattern:$0x73625140]
    %2184 = vst [vmem:[#allocation1] ss:$4 sm:$0xff] %v1691
    %v2185 = vld.sshfl [vmem:[#allocation1] sm:$0xff pattern:$0x73625140]
    %v2186 = vld.sshfl [vmem:[#allocation1 + $0x8] sm:$0xff pattern:$0x73625140]
    %v2187 = vld.sshfl [vmem:[#allocation1 + $0x10] sm:$0xff pattern:$0x73625140]
    %v2188 = vld.sshfl [vmem:[#allocation1 + $0x18] sm:$0xff pattern:$0x73625140]
    %2189 = vst [vmem:[%s2138] ss:$4 sm:$0xff] %v1699
    %v2190 = vld.sshfl [vmem:[#allocation1 + $0x20] sm:$0xff pattern:$0x73625140]
    %v2191 = vld.sshfl [vmem:[#allocation1 + $0x28] sm:$0xff pattern:$0x73625140]
    %v2192 = vld.sshfl [vmem:[#allocation1 + $0x30] sm:$0xff pattern:$0x73625140]
    %v2193 = vld.sshfl [vmem:[#allocation1 + $0x38] sm:$0xff pattern:$0x73625140]
    %2194 = vst [vmem:[#allocation1] ss:$4 sm:$0xff] %v1705
    %v2195 = vld.sshfl [vmem:[#allocation1] sm:$0xff pattern:$0x73625140]
    %v2196 = vld.sshfl [vmem:[#allocation1 + $0x8] sm:$0xff pattern:$0x73625140]
    %v2197 = vld.sshfl [vmem:[#allocation1 + $0x10] sm:$0xff pattern:$0x73625140]
    %v2198 = vld.sshfl [vmem:[#allocation1 + $0x18] sm:$0xff pattern:$0x73625140]
    %2199 = vst [vmem:[%s2138] ss:$4 sm:$0xff] %v1713
    %v2200 = vld.sshfl [vmem:[#allocation1 + $0x20] sm:$0xff pattern:$0x73625140]
    %v2201 = vld.sshfl [vmem:[#allocation1 + $0x28] sm:$0xff pattern:$0x73625140]
    %v2202 = vld.sshfl [vmem:[#allocation1 + $0x30] sm:$0xff pattern:$0x73625140]
    %v2203 = vld.sshfl [vmem:[#allocation1 + $0x38] sm:$0xff pattern:$0x73625140]
    %2204 = vst [vmem:[#allocation1] ss:$4 sm:$0xff] %v1721
    %v2205 = vld.sshfl [vmem:[#allocation1] sm:$0xff pattern:$0x73625140]
    %v2206 = vld.sshfl [vmem:[#allocation1 + $0x8] sm:$0xff pattern:$0x73625140]
    %v2207 = vld.sshfl [vmem:[#allocation1 + $0x10] sm:$0xff pattern:$0x73625140]
    %v2208 = vld.sshfl [vmem:[#allocation1 + $0x18] sm:$0xff pattern:$0x73625140]
    %2209 = vst [vmem:[%s2138] ss:$4 sm:$0xff] %v1729
    %v2210 = vld.sshfl [vmem:[#allocation1 + $0x20] sm:$0xff pattern:$0x73625140]
    %v2211 = vld.sshfl [vmem:[#allocation1 + $0x28] sm:$0xff pattern:$0x73625140]
    %v2212 = vld.sshfl [vmem:[#allocation1 + $0x30] sm:$0xff pattern:$0x73625140]
    %v2213 = vld.sshfl [vmem:[#allocation1 + $0x38] sm:$0xff pattern:$0x73625140]
    %v2278 = vpack.c.bf16 %v2135, %v2134
    %v2279 = vpack.c.bf16 %v2137, %v2136
    %v2280 = vpack.c.bf16 %v2141, %v2140
    %v2281 = vpack.c.bf16 %v2143, %v2142
    %v2282 = vpack.c.bf16 %v2146, %v2145
    %v2283 = vpack.c.bf16 %v2148, %v2147
    %v2284 = vpack.c.bf16 %v2151, %v2150
    %v2285 = vpack.c.bf16 %v2153, %v2152
    %v2286 = vpack.c.bf16 %v2156, %v2155
    %v2287 = vpack.c.bf16 %v2158, %v2157
    %v2288 = vpack.c.bf16 %v2161, %v2160
    %v2289 = vpack.c.bf16 %v2163, %v2162
    %v2290 = vpack.c.bf16 %v2166, %v2165
    %v2291 = vpack.c.bf16 %v2168, %v2167
    %v2292 = vpack.c.bf16 %v2171, %v2170
    %v2293 = vpack.c.bf16 %v2173, %v2172
    %v2294 = vpack.c.bf16 %v2176, %v2175
    %v2295 = vpack.c.bf16 %v2178, %v2177
    %v2296 = vpack.c.bf16 %v2181, %v2180
    %v2297 = vpack.c.bf16 %v2183, %v2182
    %v2298 = vpack.c.bf16 %v2186, %v2185
    %v2299 = vpack.c.bf16 %v2188, %v2187
    %v2300 = vpack.c.bf16 %v2191, %v2190
    %v2301 = vpack.c.bf16 %v2193, %v2192
    %v2302 = vpack.c.bf16 %v2196, %v2195
    %v2303 = vpack.c.bf16 %v2198, %v2197
    %v2304 = vpack.c.bf16 %v2201, %v2200
    %v2305 = vpack.c.bf16 %v2203, %v2202
    %v2306 = vpack.c.bf16 %v2206, %v2205
    %v2307 = vpack.c.bf16 %v2208, %v2207
    %v2308 = vpack.c.bf16 %v2211, %v2210
    %v2309 = vpack.c.bf16 %v2213, %v2212
    %v2342 = vrot.slane %v2278, 3
    %v2343 = vrot.slane %v2279, 6
    %v2344 = vrot.slane %v2279, 1
    %v2345 = vrot.slane %v2280, 3
    %v2346 = vrot.slane %v2281, 6
    %v2347 = vrot.slane %v2281, 1
    %v2348 = vrot.slane %v2282, 3
    %v2349 = vrot.slane %v2283, 6
    %v2350 = vrot.slane %v2283, 1
    %v2351 = vrot.slane %v2284, 3
    %v2352 = vrot.slane %v2285, 6
    %v2353 = vrot.slane %v2285, 1
    %v2354 = vrot.slane %v2286, 3
    %v2355 = vrot.slane %v2287, 6
    %v2356 = vrot.slane %v2287, 1
    %v2357 = vrot.slane %v2288, 3
    %v2358 = vrot.slane %v2289, 6
    %v2359 = vrot.slane %v2289, 1
    %v2360 = vrot.slane %v2290, 3
    %v2361 = vrot.slane %v2291, 6
    %v2362 = vrot.slane %v2291, 1
    %v2363 = vrot.slane %v2292, 3
    %v2364 = vrot.slane %v2293, 6
    %v2365 = vrot.slane %v2293, 1
    %v2366 = vrot.slane %v2294, 3
    %v2367 = vrot.slane %v2295, 6
    %v2368 = vrot.slane %v2295, 1
    %v2369 = vrot.slane %v2296, 3
    %v2370 = vrot.slane %v2297, 6
    %v2371 = vrot.slane %v2297, 1
    %v2372 = vrot.slane %v2298, 3
    %v2373 = vrot.slane %v2299, 6
    %v2374 = vrot.slane %v2299, 1
    %v2375 = vrot.slane %v2300, 3
    %v2376 = vrot.slane %v2301, 6
    %v2377 = vrot.slane %v2301, 1
    %v2378 = vrot.slane %v2302, 3
    %v2379 = vrot.slane %v2303, 6
    %v2380 = vrot.slane %v2303, 1
    %v2381 = vrot.slane %v2304, 3
    %v2382 = vrot.slane %v2305, 6
    %v2383 = vrot.slane %v2305, 1
    %v2384 = vrot.slane %v2306, 3
    %v2385 = vrot.slane %v2307, 6
    %v2386 = vrot.slane %v2307, 1
    %v2387 = vrot.slane %v2308, 3
    %v2388 = vrot.slane %v2309, 6
    %v2389 = vrot.slane %v2309, 1
    %v2392 = vsel %vm1987, %v2278, %v2342
    %v2395 = vsel %vm1991, %v2343, %v2344
    %v2396 = vsel %vm1604, %v2392, %v2395
    %v2399 = vsel %vm1987, %v2280, %v2345
    %v2402 = vsel %vm1991, %v2346, %v2347
    %v2403 = vsel %vm1604, %v2399, %v2402
    %v2406 = vsel %vm1987, %v2282, %v2348
    %v2409 = vsel %vm1991, %v2349, %v2350
    %v2410 = vsel %vm1604, %v2406, %v2409
    %v2413 = vsel %vm1987, %v2284, %v2351
    %v2416 = vsel %vm1991, %v2352, %v2353
    %v2417 = vsel %vm1604, %v2413, %v2416
    %v2420 = vsel %vm1987, %v2286, %v2354
    %v2423 = vsel %vm1991, %v2355, %v2356
    %v2424 = vsel %vm1604, %v2420, %v2423
    %v2427 = vsel %vm1987, %v2288, %v2357
    %v2430 = vsel %vm1991, %v2358, %v2359
    %v2431 = vsel %vm1604, %v2427, %v2430
    %v2434 = vsel %vm1987, %v2290, %v2360
    %v2437 = vsel %vm1991, %v2361, %v2362
    %v2438 = vsel %vm1604, %v2434, %v2437
    %v2441 = vsel %vm1987, %v2292, %v2363
    %v2444 = vsel %vm1991, %v2364, %v2365
    %v2445 = vsel %vm1604, %v2441, %v2444
    %v2448 = vsel %vm1987, %v2294, %v2366
    %v2451 = vsel %vm1991, %v2367, %v2368
    %v2452 = vsel %vm1604, %v2448, %v2451
    %v2455 = vsel %vm1987, %v2296, %v2369
    %v2458 = vsel %vm1991, %v2370, %v2371
    %v2459 = vsel %vm1604, %v2455, %v2458
    %v2462 = vsel %vm1987, %v2298, %v2372
    %v2465 = vsel %vm1991, %v2373, %v2374
    %v2466 = vsel %vm1604, %v2462, %v2465
    %v2469 = vsel %vm1987, %v2300, %v2375
    %v2472 = vsel %vm1991, %v2376, %v2377
    %v2473 = vsel %vm1604, %v2469, %v2472
    %v2476 = vsel %vm1987, %v2302, %v2378
    %v2479 = vsel %vm1991, %v2379, %v2380
    %v2480 = vsel %vm1604, %v2476, %v2479
    %v2483 = vsel %vm1987, %v2304, %v2381
    %v2486 = vsel %vm1991, %v2382, %v2383
    %v2487 = vsel %vm1604, %v2483, %v2486
    %v2490 = vsel %vm1987, %v2306, %v2384
    %v2493 = vsel %vm1991, %v2385, %v2386
    %v2494 = vsel %vm1604, %v2490, %v2493
    %v2497 = vsel %vm1987, %v2308, %v2387
    %v2500 = vsel %vm1991, %v2388, %v2389
    %v2501 = vsel %vm1604, %v2497, %v2500
    %2518 = vst [vmem:[#allocation13] sm:$0xf] %v2396
    %2519 = vst [vmem:[#allocation13 + $0x4] sm:$0xf] %v2403
    %2520 = vst [vmem:[#allocation13 + $0x8] sm:$0xf] %v2410
    %2521 = vst [vmem:[#allocation13 + $0xc] sm:$0xf] %v2417
    %2522 = vst [vmem:[#allocation13 + $0x10] sm:$0xf] %v2424
    %2523 = vst [vmem:[#allocation13 + $0x14] sm:$0xf] %v2431
    %2524 = vst [vmem:[#allocation13 + $0x18] sm:$0xf] %v2438
    %2525 = vst [vmem:[#allocation13 + $0x1c] sm:$0xf] %v2445
    %2526 = vst [vmem:[#allocation13 + $0x20] sm:$0xf] %v2452
    %2527 = vst [vmem:[#allocation13 + $0x24] sm:$0xf] %v2459
    %2528 = vst [vmem:[#allocation13 + $0x28] sm:$0xf] %v2466
    %2529 = vst [vmem:[#allocation13 + $0x2c] sm:$0xf] %v2473
    %2530 = vst [vmem:[#allocation13 + $0x30] sm:$0xf] %v2480
    %2531 = vst [vmem:[#allocation13 + $0x34] sm:$0xf] %v2487
    %2532 = vst [vmem:[#allocation13 + $0x38] sm:$0xf] %v2494
    %2533 = vst [vmem:[#allocation13 + $0x3c] sm:$0xf] %v2501
    // Predicated region
    $region50: #{tpu_custom_call.1} parent=1 // pred_check
      _
    $region51: #{tpu_custom_call.1} parent=1 // pred_check_branch
      %2535 = sbr.rel (0) target = $region53
    $region52: #{tpu_custom_call.1} parent=1 // pred_region
      %2537 = vsyncadd [#allocation5], 0
      %s2538 = sshll.u32 [#allocation12], 4
      %s2539 = int_to_ptr.vmem [resolvable:$true] %s2538
      %s2540 = sshll.u32 %s7, 4
      %s2541 = int_to_ptr.hbm [resolvable:$true] %s2540
      %2546 = dma.vmem_to_hbm [thread:$0]  %s2539, 1024, %s2541, [#allocation5], 64, 64, 4
    $region53: #{tpu_custom_call.1} parent=1 // pred_fallthru
      _
    // Predicated region
    $region54: #{tpu_custom_call.1} parent=1 // pred_check
      _
    $region55: #{tpu_custom_call.1} parent=1 // pred_check_branch
      %2548 = sbr.rel (0) target = $region57
    $region56: #{tpu_custom_call.1} parent=1 // pred_region
      %2550 = vsyncadd [#allocation14], 0
      %s2551 = sshll.u32 [#allocation13], 4
      %s2552 = int_to_ptr.vmem [resolvable:$true] %s2551
      %s2553 = sshll.u32 %s8, 4
      %s2554 = int_to_ptr.hbm [resolvable:$true] %s2553
      %2559 = dma.vmem_to_hbm [thread:$0]  %s2552, 1024, %s2554, [#allocation14], 64, 64, 4
    $region57: #{tpu_custom_call.1} parent=1 // pred_fallthru
      _
    // Predicated region
    $region58: #{tpu_custom_call.1} parent=1 // pred_check
      _
    $region59: #{tpu_custom_call.1} parent=1 // pred_check_branch
      %2561 = sbr.rel (0) target = $region61
    $region60: #{tpu_custom_call.1} parent=1 // pred_region
      %2563 = dma.done [#allocation5], 1024
    $region61: #{tpu_custom_call.1} parent=1 // pred_fallthru
      _
    // Predicated region
    $region62: #{tpu_custom_call.1} parent=1 // pred_check
      _
    $region63: #{tpu_custom_call.1} parent=1 // pred_check_branch
      %2565 = sbr.rel (0) target = $region65
    $region64: #{tpu_custom_call.1} parent=1 // pred_region
      %2567 = dma.done [#allocation14], 1024
    $region65: #{tpu_custom_call.1} parent=1 // pred_fallthru
      _
    %2568 = vsyncpa [#allocation4], 1
    %2569 = vsyncpa [#allocation7], 1
    %2570 = vsyncpa [#allocation10], 1
    %2571 = vsyncpa [#allocation5], 1
    %2572 = vsyncpa [#allocation14], 1

</llo_original>
